<compile_context>
chip_gen: v5e
topology: v5e:2x2
jax: 0.10.0
libtpu: 0.0.40
codegen_flags: <defaults>
</compile_context>

<pallas_src>
import functools
import math

import jax
import jax.numpy as jnp
from jax import lax
from jax.experimental import pallas as pl
from jax.experimental.pallas import tpu as pltpu


def _layer_norm(x, gamma, beta, eps):
    mean = jnp.mean(x, axis=-1, keepdims=True)
    var = jnp.mean((x - mean) ** 2, axis=-1, keepdims=True)
    return (x - mean) * lax.rsqrt(var + eps) * gamma + beta


def cross_layer_kernel(
    q_ref, kproj_ref, vproj_ref,
    wq_ref, bq_ref, wo_ref, bo_ref,
    w1_ref, b1_ref, w2_ref, b2_ref,
    g1_ref, be1_ref, g2_ref, be2_ref,
    o_ref,
    acc_ref, x_ref,
    *, eps, compute_dtype, s_chunk, s_true,
):
    f32 = jnp.float32
    tT, C = q_ref.shape
    nhead, S_pad, Dh = kproj_ref.shape
    n_chunks = S_pad // s_chunk
    n_fc = w1_ref.shape[0]
    needs_mask = (S_pad != s_true)

    q_cd = q_ref[...].astype(compute_dtype)                   # (tT, C)

    # ---- cross attention: static head loop outer, flash S-chunks inner ----
    acc_ref[...] = jnp.zeros_like(acc_ref)                    # Wo accumulator
    for h in range(nhead):
        # Per-head Q projection (1/sqrt(Dh) folded into wq/bq in the wrapper).
        qh = (jnp.dot(q_cd, wq_ref[h], preferred_element_type=f32)
              + bq_ref[h]).astype(compute_dtype)              # (tT, Dh)

        def chunk_body(c, carry):
            m, l, acc = carry
            start = pl.multiple_of(c * s_chunk, s_chunk)
            kh = kproj_ref[h, pl.ds(start, s_chunk), :]       # (s_chunk, Dh)
            vh = vproj_ref[h, pl.ds(start, s_chunk), :]
            # NT-style matmul (contract Dh of both operands, no transpose).
            s = lax.dot_general(
                qh, kh, dimension_numbers=(((1,), (1,)), ((), ())),
                preferred_element_type=f32)                   # (tT, s_chunk)
            if needs_mask:
                col = c * s_chunk + lax.broadcasted_iota(
                    jnp.int32, (tT, s_chunk), 1)
                s = jnp.where(col < s_true, s, jnp.float32(-1e30))
            m_new = jnp.maximum(m, jnp.max(s, axis=-1, keepdims=True))
            alpha = jnp.exp(m - m_new)
            # exp in compute_dtype (bf16 EUP on v6e/v7x); stats stay f32.
            p = jnp.exp((s - m_new).astype(compute_dtype))
            l = alpha * l + jnp.sum(p, axis=-1, keepdims=True, dtype=f32)
            acc = alpha * acc + jnp.dot(p, vh, preferred_element_type=f32)
            return m_new, l, acc

        m0 = jnp.full((tT, 1), -1e30, f32)
        l0 = jnp.zeros((tT, 1), f32)
        a0 = jnp.zeros((tT, Dh), f32)
        _, l, acc = lax.fori_loop(0, n_chunks, chunk_body, (m0, l0, a0))

        attn_h = (acc * pl.reciprocal(l, approx=True)).astype(compute_dtype)
        # Fold the head dimension into Wo: lane-dense full-width accumulate.
        acc_ref[...] += jnp.dot(attn_h, wo_ref[h], preferred_element_type=f32)

    # ---- output-proj bias + residual + LayerNorm1 ----
    x = _layer_norm(q_ref[...] + acc_ref[...] + bo_ref[...],
                    g1_ref[...], be1_ref[...], eps)
    x_ref[...] = x
    x_cd = x.astype(compute_dtype)

    # ---- feed-forward, chunked over F to bound the live hidden slab ----
    acc_ref[...] = jnp.zeros_like(acc_ref)

    @pl.loop(0, n_fc)
    def _ff(f):
        h1 = (jnp.dot(x_cd, w1_ref[f], preferred_element_type=f32)
              + b1_ref[f])
        h1 = jnp.maximum(h1, 0.0).astype(compute_dtype)       # relu
        acc_ref[...] += jnp.dot(h1, w2_ref[f], preferred_element_type=f32)

    # ---- residual + LayerNorm2 ----
    o_ref[...] = _layer_norm(
        x_ref[...] + acc_ref[...] + b2_ref[...],
        g2_ref[...], be2_ref[...], eps).astype(o_ref.dtype)


def _round_up(x, m):
    return ((x + m - 1) // m) * m


def _tile_defaults():
    """Generation-aware preferred (t_tile, s_chunk)."""
    kind = ""
    try:
        kind = jax.devices()[0].device_kind.lower()
    except Exception:
        pass
    if "v5 lite" in kind or "v5e" in kind or "v5lite" in kind:
        return 128, 256            # v5e: 128x128 MXUs, 1 vst slot -> smaller M
    return 256, 256                # v6e / v7x: 256-wide MXU -> full M / N


def cross_transformer_encoder_layer(
    q_tbc, k_sbc, params, *, nhead, eps=1e-5,
    compute_dtype=jnp.bfloat16, out_dtype=None,
    t_tile=None, s_chunk=None, f_chunk=None,
):
    """q_tbc: (T, B, C), k_sbc: (S, B, C) -> (T, B, C), PyTorch layout."""
    T, B, C = q_tbc.shape
    S = k_sbc.shape[0]
    F = params["w1"].shape[1]
    assert C % nhead == 0
    Dh = C // nhead
    f32 = jnp.float32
    out_dtype = q_tbc.dtype if out_dtype is None else out_dtype

    # ---- tile sizes; pad T / S instead of falling back to oversized blocks --
    t_pref, s_pref = _tile_defaults()
    if t_tile is None:
        t_tile = t_pref if T >= t_pref else _round_up(T, 8)
    if s_chunk is None:
        s_chunk = s_pref if S >= s_pref else _round_up(S, 8)
    assert t_tile % 8 == 0 and s_chunk % 8 == 0
    T_pad = _round_up(T, t_tile)
    S_pad = _round_up(S, s_chunk)
    n_t = T_pad // t_tile

    if f_chunk is None:
        f_chunk = F
        for cand in (512, 256, 128):
            if F % cand == 0:
                f_chunk = cand
                break
    assert F % f_chunk == 0
    n_fc = F // f_chunk

    # ---- queries: f32 (residual / LayerNorm precision), padded along T ----
    qb = jnp.transpose(q_tbc, (1, 0, 2)).astype(f32)           # (B, T, C)
    if T_pad != T:
        qb = jnp.pad(qb, ((0, 0), (0, T_pad - T), (0, 0)))

    # ---- K/V projection hoisted to XLA, head-major compute_dtype output ----
    k_cd = k_sbc.astype(compute_dtype)                         # (S, B, C)

    def kv_proj(w, b):
        y = jnp.dot(k_cd.reshape(S * B, C), w.astype(compute_dtype),
                    preferred_element_type=f32) + b.astype(f32)
        y = y.astype(compute_dtype).reshape(S, B, nhead, Dh)
        y = jnp.transpose(y, (1, 2, 0, 3))                     # (B, nhead, S, Dh)
        if S_pad != S:
            y = jnp.pad(y, ((0, 0), (0, 0), (0, S_pad - S), (0, 0)))
        return y

    kproj = kv_proj(params["wk"], params["bk"])
    vproj = kv_proj(params["wv"], params["bv"])

    # ---- weights: scale folded into Wq/bq; head-major Wq / Wo; W1/W2 split --
    scale = 1.0 / math.sqrt(Dh)
    wq = ((params["wq"].astype(f32) * scale).astype(compute_dtype)
          .reshape(C, nhead, Dh).transpose(1, 0, 2))           # (nhead, C, Dh)
    bq = (params["bq"].astype(f32) * scale).reshape(nhead, 1, Dh)
    wo = params["wo"].astype(compute_dtype).reshape(nhead, Dh, C)
    bo = params["bo"].astype(f32)                              # (1, C)
    w1 = (params["w1"].astype(compute_dtype)
          .reshape(C, n_fc, f_chunk).transpose(1, 0, 2))       # (n_fc, C, fc)
    b1 = params["b1"].astype(f32).reshape(n_fc, 1, f_chunk)
    w2 = params["w2"].astype(compute_dtype).reshape(n_fc, f_chunk, C)
    b2 = params["b2"].astype(f32)
    g1 = params["g1"].astype(f32)
    be1 = params["be1"].astype(f32)
    g2 = params["g2"].astype(f32)
    be2 = params["be2"].astype(f32)

    kernel = functools.partial(
        cross_layer_kernel, eps=eps, compute_dtype=compute_dtype,
        s_chunk=s_chunk, s_true=S)

    def const_spec(shape):
        zeros = (0,) * len(shape)
        return pl.BlockSpec(shape, lambda b, t: zeros)

    cdb = jnp.dtype(compute_dtype).itemsize
    odb = jnp.dtype(out_dtype).itemsize

    # Crude VMEM estimate: double-buffered K/V blocks (with lane padding when
    # Dh < 128), double-buffered weights, I/O tiles, scratch.
    kv_block = nhead * S_pad * max(Dh, 128) * cdb
    w_bytes = ((wq.size + wo.size + w1.size + w2.size) * cdb
               + (bq.size + bo.size + b1.size + b2.size + 4 * C) * 4)
    est = (2 * 2 * kv_block + 2 * w_bytes
           + 2 * t_tile * C * (4 + odb) + 2 * t_tile * C * 4)
    vmem_limit = int(min(max(40 << 20, int(est * 1.25)), 110 << 20))

    flops = int(2 * B * T_pad * (2 * C * C + 2 * S_pad * C + 2 * C * F))
    transcendentals = int(B * nhead * T_pad * S_pad)
    bytes_accessed = int(
        4 * B * T_pad * C + odb * B * T_pad * C
        + 2 * cdb * B * nhead * S_pad * Dh
        + cdb * (wq.size + wo.size + w1.size + w2.size)
        + 4 * (bq.size + bo.size + b1.size + b2.size + 4 * C))

    out = pl.pallas_call(
        kernel,
        out_shape=jax.ShapeDtypeStruct((B, T_pad, C), out_dtype),
        grid_spec=pltpu.PrefetchScalarGridSpec(
            num_scalar_prefetch=0,
            grid=(B, n_t),
            in_specs=[
                pl.BlockSpec((pl.Squeezed(), t_tile, C),
                             lambda b, t: (b, t, 0)),          # q
                pl.BlockSpec((pl.Squeezed(), nhead, S_pad, Dh),
                             lambda b, t: (b, 0, 0, 0)),       # projected K
                pl.BlockSpec((pl.Squeezed(), nhead, S_pad, Dh),
                             lambda b, t: (b, 0, 0, 0)),       # projected V
                const_spec((nhead, C, Dh)),                    # Wq (head-major)
                const_spec((nhead, 1, Dh)),                    # bq
                const_spec((nhead, Dh, C)),                    # Wo (head-major)
                const_spec((1, C)),                            # bo
                const_spec((n_fc, C, f_chunk)),                # W1 (F-chunked)
                const_spec((n_fc, 1, f_chunk)),                # b1
                const_spec((n_fc, f_chunk, C)),                # W2 (F-chunked)
                const_spec((1, C)),                            # b2
                const_spec((1, C)), const_spec((1, C)),        # LN1 gamma/beta
                const_spec((1, C)), const_spec((1, C)),        # LN2 gamma/beta
            ],
            out_specs=pl.BlockSpec((pl.Squeezed(), t_tile, C),
                                   lambda b, t: (b, t, 0)),
            scratch_shapes=[
                pltpu.VMEM((t_tile, C), jnp.float32),   # Wo / FF accumulator
                pltpu.VMEM((t_tile, C), jnp.float32),   # x (post-LN1) slab
            ],
        ),
        compiler_params=pltpu.CompilerParams(
            dimension_semantics=("parallel", "parallel"),
            vmem_limit_bytes=vmem_limit,
        ),
        cost_estimate=pl.CostEstimate(
            flops=flops, transcendentals=transcendentals,
            bytes_accessed=bytes_accessed),
    )(qb, kproj, vproj, wq, bq, wo, bo, w1, b1, w2, b2, g1, be1, g2, be2)

    if T_pad != T:
        out = out[:, :T]
    return jnp.transpose(out, (1, 0, 2))


def reference(q_tbc, k_sbc, params, *, nhead, eps=1e-5):
    """Pure-JAX f32 reference implementing the same forward pass."""
    qb = jnp.transpose(q_tbc, (1, 0, 2))
    kb = jnp.transpose(k_sbc, (1, 0, 2))
    B, T, C = qb.shape
    S = kb.shape[1]
    Dh = C // nhead
    scale = 1.0 / (Dh ** 0.5)

    Q = qb @ params["wq"] + params["bq"]
    K = kb @ params["wk"] + params["bk"]
    V = kb @ params["wv"] + params["bv"]
    Qh = Q.reshape(B, T, nhead, Dh).transpose(0, 2, 1, 3)
    Kh = K.reshape(B, S, nhead, Dh).transpose(0, 2, 1, 3)
    Vh = V.reshape(B, S, nhead, Dh).transpose(0, 2, 1, 3)
    s = jnp.einsum("bhtd,bhsd->bhts", Qh * scale, Kh)
    p = jax.nn.softmax(s, axis=-1)
    o = jnp.einsum("bhts,bhsd->bhtd", p, Vh)
    o = o.transpose(0, 2, 1, 3).reshape(B, T, C)
    o = o @ params["wo"] + params["bo"]

    x = _layer_norm(qb + o, params["g1"], params["be1"], eps)
    ff = jnp.maximum(x @ params["w1"] + params["b1"], 0.0) @ params["w2"] + params["b2"]
    x = _layer_norm(x + ff, params["g2"], params["be2"], eps)
    return jnp.transpose(x, (1, 0, 2))


def init_params(key, d_model, dim_ff):
    ks = jax.random.split(key, 8)
    sc = 0.05
    return {
        "wq": sc * jax.random.normal(ks[0], (d_model, d_model), jnp.float32),
        "wk": sc * jax.random.normal(ks[1], (d_model, d_model), jnp.float32),
        "wv": sc * jax.random.normal(ks[2], (d_model, d_model), jnp.float32),
        "wo": sc * jax.random.normal(ks[3], (d_model, d_model), jnp.float32),
        "w1": sc * jax.random.normal(ks[4], (d_model, dim_ff), jnp.float32),
        "w2": sc * jax.random.normal(ks[5], (dim_ff, d_model), jnp.float32),
        "bq": 0.01 * jax.random.normal(ks[6], (1, d_model), jnp.float32),
        "bk": jnp.zeros((1, d_model), jnp.float32),
        "bv": 0.01 * jax.random.normal(ks[7], (1, d_model), jnp.float32),
        "bo": jnp.zeros((1, d_model), jnp.float32),
        "b1": jnp.zeros((1, dim_ff), jnp.float32),
        "b2": jnp.zeros((1, d_model), jnp.float32),
        "g1": jnp.ones((1, d_model), jnp.float32),
        "be1": jnp.zeros((1, d_model), jnp.float32),
        "g2": jnp.ones((1, d_model), jnp.float32),
        "be2": jnp.zeros((1, d_model), jnp.float32),
    }


if __name__ == "__main__":
    # Small shapes consistent with the module's (T, B, C) / (S, B, C) forward.
    T, S, B = 16, 16, 2
    d_model, nhead, dim_ff = 32, 4, 64

    key = jax.random.PRNGKey(0)
    kq, kk, kp, kq2, kk2 = jax.random.split(key, 5)
    q = jax.random.normal(kq, (T, B, d_model), jnp.float32)
    k = jax.random.normal(kk, (S, B, d_model), jnp.float32)
    params = init_params(kp, d_model, dim_ff)

    ref = reference(q, k, params, nhead=nhead)

    # f32 MXU path; small t_tile/s_chunk/f_chunk force 2 T-tiles, 2 S-chunks
    # and 2 FF chunks so every loop in the kernel is exercised.
    out_f32 = jax.block_until_ready(cross_transformer_encoder_layer(
        q, k, params, nhead=nhead, compute_dtype=jnp.float32,
        t_tile=8, s_chunk=8, f_chunk=32))
    assert out_f32.shape == (T, B, d_model)
    assert jnp.max(jnp.abs(out_f32 - ref)) < 2e-2, "f32 path mismatch vs reference"

    # Default bf16 MXU path (f32 accumulation / softmax statistics).
    out_bf16 = jax.block_until_ready(cross_transformer_encoder_layer(
        q, k, params, nhead=nhead, t_tile=8, s_chunk=8))
    assert out_bf16.shape == (T, B, d_model)
    assert jnp.max(jnp.abs(out_bf16 - ref)) < 1.5e-1, "bf16 path mismatch vs reference"

    # Ragged T / S: exercises the T/S padding + padded-key masking path.
    T2, S2 = 12, 20
    q2 = jax.random.normal(kq2, (T2, B, d_model), jnp.float32)
    k2 = jax.random.normal(kk2, (S2, B, d_model), jnp.float32)
    ref2 = reference(q2, k2, params, nhead=nhead)
    out2 = jax.block_until_ready(cross_transformer_encoder_layer(
        q2, k2, params, nhead=nhead, compute_dtype=jnp.float32,
        t_tile=8, s_chunk=8))
    assert out2.shape == (T2, B, d_model)
    assert jnp.max(jnp.abs(out2 - ref2)) < 2e-2, "padded/masked path mismatch"

    print("KERNEL_OK")
</pallas_src>

<mosaic_0001>
module attributes {stable_mosaic.version = 11 : i64} {
  func.func @cross_layer_kernel(%arg0: i32, %arg1: i32, %arg2: memref<1x8x32xf32, #tpu.memory_space<vmem>>, %arg3: memref<1x4x16x8xf32, #tpu.memory_space<vmem>>, %arg4: memref<1x4x16x8xf32, #tpu.memory_space<vmem>>, %arg5: memref<4x32x8xf32, #tpu.memory_space<vmem>>, %arg6: memref<4x1x8xf32, #tpu.memory_space<vmem>>, %arg7: memref<4x8x32xf32, #tpu.memory_space<vmem>>, %arg8: memref<1x32xf32, #tpu.memory_space<vmem>>, %arg9: memref<2x32x32xf32, #tpu.memory_space<vmem>>, %arg10: memref<2x1x32xf32, #tpu.memory_space<vmem>>, %arg11: memref<2x32x32xf32, #tpu.memory_space<vmem>>, %arg12: memref<1x32xf32, #tpu.memory_space<vmem>>, %arg13: memref<1x32xf32, #tpu.memory_space<vmem>>, %arg14: memref<1x32xf32, #tpu.memory_space<vmem>>, %arg15: memref<1x32xf32, #tpu.memory_space<vmem>>, %arg16: memref<1x32xf32, #tpu.memory_space<vmem>>, %arg17: memref<1x8x32xf32, #tpu.memory_space<vmem>>, %arg18: memref<8x32xf32, #tpu.memory_space<vmem>>, %arg19: memref<8x32xf32, #tpu.memory_space<vmem>>) attributes {dimension_semantics = [#tpu.dimension_semantics<parallel>, #tpu.dimension_semantics<parallel>], iteration_bounds = array<i64: 2, 2>, scalar_prefetch = 0 : i64, scratch_operands = 2 : i64, tpu.core_type = #tpu.core_type<tc>, window_params = [{transform_indices = @transform_0, window_bounds = array<i64: 1, 8, 32>}, {transform_indices = @transform_1, window_bounds = array<i64: 1, 4, 16, 8>}, {transform_indices = @transform_2, window_bounds = array<i64: 1, 4, 16, 8>}, {pipeline_mode = #tpu.pipeline_mode<synchronous>, transform_indices = @transform_3, window_bounds = array<i64: 4, 32, 8>}, {pipeline_mode = #tpu.pipeline_mode<synchronous>, transform_indices = @transform_4, window_bounds = array<i64: 4, 1, 8>}, {pipeline_mode = #tpu.pipeline_mode<synchronous>, transform_indices = @transform_5, window_bounds = array<i64: 4, 8, 32>}, {pipeline_mode = #tpu.pipeline_mode<synchronous>, transform_indices = @transform_6, window_bounds = array<i64: 1, 32>}, {pipeline_mode = #tpu.pipeline_mode<synchronous>, transform_indices = @transform_7, window_bounds = array<i64: 2, 32, 32>}, {pipeline_mode = #tpu.pipeline_mode<synchronous>, transform_indices = @transform_8, window_bounds = array<i64: 2, 1, 32>}, {pipeline_mode = #tpu.pipeline_mode<synchronous>, transform_indices = @transform_9, window_bounds = array<i64: 2, 32, 32>}, {pipeline_mode = #tpu.pipeline_mode<synchronous>, transform_indices = @transform_10, window_bounds = array<i64: 1, 32>}, {pipeline_mode = #tpu.pipeline_mode<synchronous>, transform_indices = @transform_11, window_bounds = array<i64: 1, 32>}, {pipeline_mode = #tpu.pipeline_mode<synchronous>, transform_indices = @transform_12, window_bounds = array<i64: 1, 32>}, {pipeline_mode = #tpu.pipeline_mode<synchronous>, transform_indices = @transform_13, window_bounds = array<i64: 1, 32>}, {pipeline_mode = #tpu.pipeline_mode<synchronous>, transform_indices = @transform_14, window_bounds = array<i64: 1, 32>}, {transform_indices = @transform_15, window_bounds = array<i64: 1, 8, 32>}]} {
    %c0 = arith.constant 0 : index
    %c0_0 = arith.constant 0 : index
    %c0_1 = arith.constant 0 : index
    %0 = vector.load %arg2[%c0, %c0_0, %c0_1] : memref<1x8x32xf32, #tpu.memory_space<vmem>>, vector<1x8x32xf32>
    %1 = vector.shape_cast %0 : vector<1x8x32xf32> to vector<8x32xf32>
    %cst = arith.constant 0.000000e+00 : f32
    %2 = vector.broadcast %cst : f32 to vector<8x32xf32>
    %c0_2 = arith.constant 0 : index
    %c0_3 = arith.constant 0 : index
    %3 = vector.load %arg18[%c0_2, %c0_3] : memref<8x32xf32, #tpu.memory_space<vmem>>, vector<8x32xf32>
    tpu.vector_store %arg18[%c0_2, %c0_3], %2 {strides = array<i32>} : memref<8x32xf32, #tpu.memory_space<vmem>>, vector<8x32xf32>,
    %c0_4 = arith.constant 0 : index
    %c0_5 = arith.constant 0 : index
    %c0_6 = arith.constant 0 : index
    %4 = vector.load %arg5[%c0_4, %c0_5, %c0_6] : memref<4x32x8xf32, #tpu.memory_space<vmem>>, vector<1x32x8xf32>
    %5 = vector.shape_cast %4 : vector<1x32x8xf32> to vector<32x8xf32>
    %cst_7 = arith.constant dense<0.000000e+00> : vector<8x8xf32>
    %6 = tpu.matmul %1, %5, %cst_7 {dimension_numbers = #tpu.dot_dimension_numbers<[1], [0], [0], [1], [0, 0, 1, 1], [], []>} : vector<8x32xf32>, vector<32x8xf32>, vector<8x8xf32> -> vector<8x8xf32>
    %c0_8 = arith.constant 0 : index
    %c0_9 = arith.constant 0 : index
    %c0_10 = arith.constant 0 : index
    %7 = vector.load %arg6[%c0_8, %c0_9, %c0_10] : memref<4x1x8xf32, #tpu.memory_space<vmem>>, vector<1x1x8xf32>
    %8 = vector.shape_cast %7 : vector<1x1x8xf32> to vector<1x8xf32>
    %9 = vector.broadcast %8 : vector<1x8xf32> to vector<8x8xf32>
    %10 = arith.addf %6, %9 : vector<8x8xf32>
    %cst_11 = arith.constant -1.000000e+30 : f32
    %11 = vector.broadcast %cst_11 : f32 to vector<8x1xf32>
    %cst_12 = arith.constant 0.000000e+00 : f32
    %12 = vector.broadcast %cst_12 : f32 to vector<8x1xf32>
    %cst_13 = arith.constant 0.000000e+00 : f32
    %13 = vector.broadcast %cst_13 : f32 to vector<8x8xf32>
    %c0_i32 = arith.constant 0 : i32
    %c2_i32 = arith.constant 2 : i32
    %14 = arith.addi %c0_i32, %c2_i32 : i32
    %c1_i32 = arith.constant 1 : i32
    %15:3 = scf.for %arg20 = %c0_i32 to %14 step %c1_i32 iter_args(%arg21 = %11, %arg22 = %12, %arg23 = %13) -> (vector<8x1xf32>, vector<8x1xf32>, vector<8x8xf32>)  : i32 {
      %c8_i32 = arith.constant 8 : i32
      %156 = arith.muli %arg20, %c8_i32 : i32
      %157 = tpu.assume_multiple %156, 8 : i32
      %c0_129 = arith.constant 0 : index
      %c0_130 = arith.constant 0 : index
      %158 = arith.index_cast %157 : i32 to index
      %c0_131 = arith.constant 0 : index
      %159 = vector.load %arg3[%c0_129, %c0_130, %158, %c0_131] : memref<1x4x16x8xf32, #tpu.memory_space<vmem>>, vector<1x1x8x8xf32>
      %160 = vector.shape_cast %159 : vector<1x1x8x8xf32> to vector<8x8xf32>
      %c0_132 = arith.constant 0 : index
      %c0_133 = arith.constant 0 : index
      %161 = arith.index_cast %157 : i32 to index
      %c0_134 = arith.constant 0 : index
      %162 = vector.load %arg4[%c0_132, %c0_133, %161, %c0_134] : memref<1x4x16x8xf32, #tpu.memory_space<vmem>>, vector<1x1x8x8xf32>
      %163 = vector.shape_cast %162 : vector<1x1x8x8xf32> to vector<8x8xf32>
      %cst_135 = arith.constant dense<0.000000e+00> : vector<8x8xf32>
      %164 = tpu.matmul %10, %160, %cst_135 {dimension_numbers = #tpu.dot_dimension_numbers<[1], [1], [0], [0], [0, 0, 1, 0], [], []>} : vector<8x8xf32>, vector<8x8xf32>, vector<8x8xf32> -> vector<8x8xf32>
      %cst_136 = arith.constant dense<0xFF800000> : vector<8xf32>
      %165 = vector.multi_reduction <maximumf>, %164, %cst_136 [1] : vector<8x8xf32> to vector<8xf32>
      %166 = vector.shape_cast %165 : vector<8xf32> to vector<8x1xf32>
      %167 = arith.maximumf %arg21, %166 : vector<8x1xf32>
      %168 = arith.subf %arg21, %167 : vector<8x1xf32>
      %169 = math.exp %168 : vector<8x1xf32>
      %170 = vector.broadcast %167 : vector<8x1xf32> to vector<8x8xf32>
      %171 = arith.subf %164, %170 : vector<8x8xf32>
      %172 = math.exp %171 : vector<8x8xf32>
      %173 = arith.mulf %169, %arg22 : vector<8x1xf32>
      %cst_137 = arith.constant dense<0.000000e+00> : vector<8xf32>
      %174 = vector.multi_reduction <add>, %172, %cst_137 [1] : vector<8x8xf32> to vector<8xf32>
      %175 = vector.shape_cast %174 : vector<8xf32> to vector<8x1xf32>
      %176 = arith.addf %173, %175 : vector<8x1xf32>
      %177 = vector.broadcast %169 : vector<8x1xf32> to vector<8x8xf32>
      %178 = arith.mulf %177, %arg23 : vector<8x8xf32>
      %cst_138 = arith.constant dense<0.000000e+00> : vector<8x8xf32>
      %179 = tpu.matmul %172, %163, %cst_138 {dimension_numbers = #tpu.dot_dimension_numbers<[1], [0], [0], [1], [0, 0, 1, 1], [], []>} : vector<8x8xf32>, vector<8x8xf32>, vector<8x8xf32> -> vector<8x8xf32>
      %180 = arith.addf %178, %179 : vector<8x8xf32>
      scf.yield %167, %176, %180 : vector<8x1xf32>, vector<8x1xf32>, vector<8x8xf32>
    }
    %c2_i32_14 = arith.constant 2 : i32
    %16 = tpu.reciprocal %15#1 {approx = true} : vector<8x1xf32> -> vector<8x1xf32>
    %17 = vector.broadcast %16 : vector<8x1xf32> to vector<8x8xf32>
    %18 = arith.mulf %15#2, %17 : vector<8x8xf32>
    %c0_15 = arith.constant 0 : index
    %c0_16 = arith.constant 0 : index
    %19 = vector.load %arg18[%c0_15, %c0_16] : memref<8x32xf32, #tpu.memory_space<vmem>>, vector<8x32xf32>
    %c0_17 = arith.constant 0 : index
    %c0_18 = arith.constant 0 : index
    %c0_19 = arith.constant 0 : index
    %20 = vector.load %arg7[%c0_17, %c0_18, %c0_19] : memref<4x8x32xf32, #tpu.memory_space<vmem>>, vector<1x8x32xf32>
    %21 = vector.shape_cast %20 : vector<1x8x32xf32> to vector<8x32xf32>
    %cst_20 = arith.constant dense<0.000000e+00> : vector<8x32xf32>
    %22 = tpu.matmul %18, %21, %cst_20 {dimension_numbers = #tpu.dot_dimension_numbers<[1], [0], [0], [1], [0, 0, 1, 1], [], []>} : vector<8x8xf32>, vector<8x32xf32>, vector<8x32xf32> -> vector<8x32xf32>
    %23 = arith.addf %19, %22 : vector<8x32xf32>
    %c0_21 = arith.constant 0 : index
    %c0_22 = arith.constant 0 : index
    %24 = vector.load %arg18[%c0_21, %c0_22] : memref<8x32xf32, #tpu.memory_space<vmem>>, vector<8x32xf32>
    tpu.vector_store %arg18[%c0_21, %c0_22], %23 {strides = array<i32>} : memref<8x32xf32, #tpu.memory_space<vmem>>, vector<8x32xf32>,
    %c1 = arith.constant 1 : index
    %c0_23 = arith.constant 0 : index
    %c0_24 = arith.constant 0 : index
    %25 = vector.load %arg5[%c1, %c0_23, %c0_24] : memref<4x32x8xf32, #tpu.memory_space<vmem>>, vector<1x32x8xf32>
    %26 = vector.shape_cast %25 : vector<1x32x8xf32> to vector<32x8xf32>
    %cst_25 = arith.constant dense<0.000000e+00> : vector<8x8xf32>
    %27 = tpu.matmul %1, %26, %cst_25 {dimension_numbers = #tpu.dot_dimension_numbers<[1], [0], [0], [1], [0, 0, 1, 1], [], []>} : vector<8x32xf32>, vector<32x8xf32>, vector<8x8xf32> -> vector<8x8xf32>
    %c1_26 = arith.constant 1 : index
    %c0_27 = arith.constant 0 : index
    %c0_28 = arith.constant 0 : index
    %28 = vector.load %arg6[%c1_26, %c0_27, %c0_28] : memref<4x1x8xf32, #tpu.memory_space<vmem>>, vector<1x1x8xf32>
    %29 = vector.shape_cast %28 : vector<1x1x8xf32> to vector<1x8xf32>
    %30 = vector.broadcast %29 : vector<1x8xf32> to vector<8x8xf32>
    %31 = arith.addf %27, %30 : vector<8x8xf32>
    %cst_29 = arith.constant -1.000000e+30 : f32
    %32 = vector.broadcast %cst_29 : f32 to vector<8x1xf32>
    %cst_30 = arith.constant 0.000000e+00 : f32
    %33 = vector.broadcast %cst_30 : f32 to vector<8x1xf32>
    %cst_31 = arith.constant 0.000000e+00 : f32
    %34 = vector.broadcast %cst_31 : f32 to vector<8x8xf32>
    %c0_i32_32 = arith.constant 0 : i32
    %c2_i32_33 = arith.constant 2 : i32
    %35 = arith.addi %c0_i32_32, %c2_i32_33 : i32
    %c1_i32_34 = arith.constant 1 : i32
    %36:3 = scf.for %arg20 = %c0_i32_32 to %35 step %c1_i32_34 iter_args(%arg21 = %32, %arg22 = %33, %arg23 = %34) -> (vector<8x1xf32>, vector<8x1xf32>, vector<8x8xf32>)  : i32 {
      %c8_i32 = arith.constant 8 : i32
      %156 = arith.muli %arg20, %c8_i32 : i32
      %157 = tpu.assume_multiple %156, 8 : i32
      %c0_129 = arith.constant 0 : index
      %c1_130 = arith.constant 1 : index
      %158 = arith.index_cast %157 : i32 to index
      %c0_131 = arith.constant 0 : index
      %159 = vector.load %arg3[%c0_129, %c1_130, %158, %c0_131] : memref<1x4x16x8xf32, #tpu.memory_space<vmem>>, vector<1x1x8x8xf32>
      %160 = vector.shape_cast %159 : vector<1x1x8x8xf32> to vector<8x8xf32>
      %c0_132 = arith.constant 0 : index
      %c1_133 = arith.constant 1 : index
      %161 = arith.index_cast %157 : i32 to index
      %c0_134 = arith.constant 0 : index
      %162 = vector.load %arg4[%c0_132, %c1_133, %161, %c0_134] : memref<1x4x16x8xf32, #tpu.memory_space<vmem>>, vector<1x1x8x8xf32>
      %163 = vector.shape_cast %162 : vector<1x1x8x8xf32> to vector<8x8xf32>
      %cst_135 = arith.constant dense<0.000000e+00> : vector<8x8xf32>
      %164 = tpu.matmul %31, %160, %cst_135 {dimension_numbers = #tpu.dot_dimension_numbers<[1], [1], [0], [0], [0, 0, 1, 0], [], []>} : vector<8x8xf32>, vector<8x8xf32>, vector<8x8xf32> -> vector<8x8xf32>
      %cst_136 = arith.constant dense<0xFF800000> : vector<8xf32>
      %165 = vector.multi_reduction <maximumf>, %164, %cst_136 [1] : vector<8x8xf32> to vector<8xf32>
      %166 = vector.shape_cast %165 : vector<8xf32> to vector<8x1xf32>
      %167 = arith.maximumf %arg21, %166 : vector<8x1xf32>
      %168 = arith.subf %arg21, %167 : vector<8x1xf32>
      %169 = math.exp %168 : vector<8x1xf32>
      %170 = vector.broadcast %167 : vector<8x1xf32> to vector<8x8xf32>
      %171 = arith.subf %164, %170 : vector<8x8xf32>
      %172 = math.exp %171 : vector<8x8xf32>
      %173 = arith.mulf %169, %arg22 : vector<8x1xf32>
      %cst_137 = arith.constant dense<0.000000e+00> : vector<8xf32>
      %174 = vector.multi_reduction <add>, %172, %cst_137 [1] : vector<8x8xf32> to vector<8xf32>
      %175 = vector.shape_cast %174 : vector<8xf32> to vector<8x1xf32>
      %176 = arith.addf %173, %175 : vector<8x1xf32>
      %177 = vector.broadcast %169 : vector<8x1xf32> to vector<8x8xf32>
      %178 = arith.mulf %177, %arg23 : vector<8x8xf32>
      %cst_138 = arith.constant dense<0.000000e+00> : vector<8x8xf32>
      %179 = tpu.matmul %172, %163, %cst_138 {dimension_numbers = #tpu.dot_dimension_numbers<[1], [0], [0], [1], [0, 0, 1, 1], [], []>} : vector<8x8xf32>, vector<8x8xf32>, vector<8x8xf32> -> vector<8x8xf32>
      %180 = arith.addf %178, %179 : vector<8x8xf32>
      scf.yield %167, %176, %180 : vector<8x1xf32>, vector<8x1xf32>, vector<8x8xf32>
    }
    %c2_i32_35 = arith.constant 2 : i32
    %37 = tpu.reciprocal %36#1 {approx = true} : vector<8x1xf32> -> vector<8x1xf32>
    %38 = vector.broadcast %37 : vector<8x1xf32> to vector<8x8xf32>
    %39 = arith.mulf %36#2, %38 : vector<8x8xf32>
    %c0_36 = arith.constant 0 : index
    %c0_37 = arith.constant 0 : index
    %40 = vector.load %arg18[%c0_36, %c0_37] : memref<8x32xf32, #tpu.memory_space<vmem>>, vector<8x32xf32>
    %c1_38 = arith.constant 1 : index
    %c0_39 = arith.constant 0 : index
    %c0_40 = arith.constant 0 : index
    %41 = vector.load %arg7[%c1_38, %c0_39, %c0_40] : memref<4x8x32xf32, #tpu.memory_space<vmem>>, vector<1x8x32xf32>
    %42 = vector.shape_cast %41 : vector<1x8x32xf32> to vector<8x32xf32>
    %cst_41 = arith.constant dense<0.000000e+00> : vector<8x32xf32>
    %43 = tpu.matmul %39, %42, %cst_41 {dimension_numbers = #tpu.dot_dimension_numbers<[1], [0], [0], [1], [0, 0, 1, 1], [], []>} : vector<8x8xf32>, vector<8x32xf32>, vector<8x32xf32> -> vector<8x32xf32>
    %44 = arith.addf %40, %43 : vector<8x32xf32>
    %c0_42 = arith.constant 0 : index
    %c0_43 = arith.constant 0 : index
    %45 = vector.load %arg18[%c0_42, %c0_43] : memref<8x32xf32, #tpu.memory_space<vmem>>, vector<8x32xf32>
    tpu.vector_store %arg18[%c0_42, %c0_43], %44 {strides = array<i32>} : memref<8x32xf32, #tpu.memory_space<vmem>>, vector<8x32xf32>,
    %c2 = arith.constant 2 : index
    %c0_44 = arith.constant 0 : index
    %c0_45 = arith.constant 0 : index
    %46 = vector.load %arg5[%c2, %c0_44, %c0_45] : memref<4x32x8xf32, #tpu.memory_space<vmem>>, vector<1x32x8xf32>
    %47 = vector.shape_cast %46 : vector<1x32x8xf32> to vector<32x8xf32>
    %cst_46 = arith.constant dense<0.000000e+00> : vector<8x8xf32>
    %48 = tpu.matmul %1, %47, %cst_46 {dimension_numbers = #tpu.dot_dimension_numbers<[1], [0], [0], [1], [0, 0, 1, 1], [], []>} : vector<8x32xf32>, vector<32x8xf32>, vector<8x8xf32> -> vector<8x8xf32>
    %c2_47 = arith.constant 2 : index
    %c0_48 = arith.constant 0 : index
    %c0_49 = arith.constant 0 : index
    %49 = vector.load %arg6[%c2_47, %c0_48, %c0_49] : memref<4x1x8xf32, #tpu.memory_space<vmem>>, vector<1x1x8xf32>
    %50 = vector.shape_cast %49 : vector<1x1x8xf32> to vector<1x8xf32>
    %51 = vector.broadcast %50 : vector<1x8xf32> to vector<8x8xf32>
    %52 = arith.addf %48, %51 : vector<8x8xf32>
    %cst_50 = arith.constant -1.000000e+30 : f32
    %53 = vector.broadcast %cst_50 : f32 to vector<8x1xf32>
    %cst_51 = arith.constant 0.000000e+00 : f32
    %54 = vector.broadcast %cst_51 : f32 to vector<8x1xf32>
    %cst_52 = arith.constant 0.000000e+00 : f32
    %55 = vector.broadcast %cst_52 : f32 to vector<8x8xf32>
    %c0_i32_53 = arith.constant 0 : i32
    %c2_i32_54 = arith.constant 2 : i32
    %56 = arith.addi %c0_i32_53, %c2_i32_54 : i32
    %c1_i32_55 = arith.constant 1 : i32
    %57:3 = scf.for %arg20 = %c0_i32_53 to %56 step %c1_i32_55 iter_args(%arg21 = %53, %arg22 = %54, %arg23 = %55) -> (vector<8x1xf32>, vector<8x1xf32>, vector<8x8xf32>)  : i32 {
      %c8_i32 = arith.constant 8 : i32
      %156 = arith.muli %arg20, %c8_i32 : i32
      %157 = tpu.assume_multiple %156, 8 : i32
      %c0_129 = arith.constant 0 : index
      %c2_130 = arith.constant 2 : index
      %158 = arith.index_cast %157 : i32 to index
      %c0_131 = arith.constant 0 : index
      %159 = vector.load %arg3[%c0_129, %c2_130, %158, %c0_131] : memref<1x4x16x8xf32, #tpu.memory_space<vmem>>, vector<1x1x8x8xf32>
      %160 = vector.shape_cast %159 : vector<1x1x8x8xf32> to vector<8x8xf32>
      %c0_132 = arith.constant 0 : index
      %c2_133 = arith.constant 2 : index
      %161 = arith.index_cast %157 : i32 to index
      %c0_134 = arith.constant 0 : index
      %162 = vector.load %arg4[%c0_132, %c2_133, %161, %c0_134] : memref<1x4x16x8xf32, #tpu.memory_space<vmem>>, vector<1x1x8x8xf32>
      %163 = vector.shape_cast %162 : vector<1x1x8x8xf32> to vector<8x8xf32>
      %cst_135 = arith.constant dense<0.000000e+00> : vector<8x8xf32>
      %164 = tpu.matmul %52, %160, %cst_135 {dimension_numbers = #tpu.dot_dimension_numbers<[1], [1], [0], [0], [0, 0, 1, 0], [], []>} : vector<8x8xf32>, vector<8x8xf32>, vector<8x8xf32> -> vector<8x8xf32>
      %cst_136 = arith.constant dense<0xFF800000> : vector<8xf32>
      %165 = vector.multi_reduction <maximumf>, %164, %cst_136 [1] : vector<8x8xf32> to vector<8xf32>
      %166 = vector.shape_cast %165 : vector<8xf32> to vector<8x1xf32>
      %167 = arith.maximumf %arg21, %166 : vector<8x1xf32>
      %168 = arith.subf %arg21, %167 : vector<8x1xf32>
      %169 = math.exp %168 : vector<8x1xf32>
      %170 = vector.broadcast %167 : vector<8x1xf32> to vector<8x8xf32>
      %171 = arith.subf %164, %170 : vector<8x8xf32>
      %172 = math.exp %171 : vector<8x8xf32>
      %173 = arith.mulf %169, %arg22 : vector<8x1xf32>
      %cst_137 = arith.constant dense<0.000000e+00> : vector<8xf32>
      %174 = vector.multi_reduction <add>, %172, %cst_137 [1] : vector<8x8xf32> to vector<8xf32>
      %175 = vector.shape_cast %174 : vector<8xf32> to vector<8x1xf32>
      %176 = arith.addf %173, %175 : vector<8x1xf32>
      %177 = vector.broadcast %169 : vector<8x1xf32> to vector<8x8xf32>
      %178 = arith.mulf %177, %arg23 : vector<8x8xf32>
      %cst_138 = arith.constant dense<0.000000e+00> : vector<8x8xf32>
      %179 = tpu.matmul %172, %163, %cst_138 {dimension_numbers = #tpu.dot_dimension_numbers<[1], [0], [0], [1], [0, 0, 1, 1], [], []>} : vector<8x8xf32>, vector<8x8xf32>, vector<8x8xf32> -> vector<8x8xf32>
      %180 = arith.addf %178, %179 : vector<8x8xf32>
      scf.yield %167, %176, %180 : vector<8x1xf32>, vector<8x1xf32>, vector<8x8xf32>
    }
    %c2_i32_56 = arith.constant 2 : i32
    %58 = tpu.reciprocal %57#1 {approx = true} : vector<8x1xf32> -> vector<8x1xf32>
    %59 = vector.broadcast %58 : vector<8x1xf32> to vector<8x8xf32>
    %60 = arith.mulf %57#2, %59 : vector<8x8xf32>
    %c0_57 = arith.constant 0 : index
    %c0_58 = arith.constant 0 : index
    %61 = vector.load %arg18[%c0_57, %c0_58] : memref<8x32xf32, #tpu.memory_space<vmem>>, vector<8x32xf32>
    %c2_59 = arith.constant 2 : index
    %c0_60 = arith.constant 0 : index
    %c0_61 = arith.constant 0 : index
    %62 = vector.load %arg7[%c2_59, %c0_60, %c0_61] : memref<4x8x32xf32, #tpu.memory_space<vmem>>, vector<1x8x32xf32>
    %63 = vector.shape_cast %62 : vector<1x8x32xf32> to vector<8x32xf32>
    %cst_62 = arith.constant dense<0.000000e+00> : vector<8x32xf32>
    %64 = tpu.matmul %60, %63, %cst_62 {dimension_numbers = #tpu.dot_dimension_numbers<[1], [0], [0], [1], [0, 0, 1, 1], [], []>} : vector<8x8xf32>, vector<8x32xf32>, vector<8x32xf32> -> vector<8x32xf32>
    %65 = arith.addf %61, %64 : vector<8x32xf32>
    %c0_63 = arith.constant 0 : index
    %c0_64 = arith.constant 0 : index
    %66 = vector.load %arg18[%c0_63, %c0_64] : memref<8x32xf32, #tpu.memory_space<vmem>>, vector<8x32xf32>
    tpu.vector_store %arg18[%c0_63, %c0_64], %65 {strides = array<i32>} : memref<8x32xf32, #tpu.memory_space<vmem>>, vector<8x32xf32>,
    %c3 = arith.constant 3 : index
    %c0_65 = arith.constant 0 : index
    %c0_66 = arith.constant 0 : index
    %67 = vector.load %arg5[%c3, %c0_65, %c0_66] : memref<4x32x8xf32, #tpu.memory_space<vmem>>, vector<1x32x8xf32>
    %68 = vector.shape_cast %67 : vector<1x32x8xf32> to vector<32x8xf32>
    %cst_67 = arith.constant dense<0.000000e+00> : vector<8x8xf32>
    %69 = tpu.matmul %1, %68, %cst_67 {dimension_numbers = #tpu.dot_dimension_numbers<[1], [0], [0], [1], [0, 0, 1, 1], [], []>} : vector<8x32xf32>, vector<32x8xf32>, vector<8x8xf32> -> vector<8x8xf32>
    %c3_68 = arith.constant 3 : index
    %c0_69 = arith.constant 0 : index
    %c0_70 = arith.constant 0 : index
    %70 = vector.load %arg6[%c3_68, %c0_69, %c0_70] : memref<4x1x8xf32, #tpu.memory_space<vmem>>, vector<1x1x8xf32>
    %71 = vector.shape_cast %70 : vector<1x1x8xf32> to vector<1x8xf32>
    %72 = vector.broadcast %71 : vector<1x8xf32> to vector<8x8xf32>
    %73 = arith.addf %69, %72 : vector<8x8xf32>
    %cst_71 = arith.constant -1.000000e+30 : f32
    %74 = vector.broadcast %cst_71 : f32 to vector<8x1xf32>
    %cst_72 = arith.constant 0.000000e+00 : f32
    %75 = vector.broadcast %cst_72 : f32 to vector<8x1xf32>
    %cst_73 = arith.constant 0.000000e+00 : f32
    %76 = vector.broadcast %cst_73 : f32 to vector<8x8xf32>
    %c0_i32_74 = arith.constant 0 : i32
    %c2_i32_75 = arith.constant 2 : i32
    %77 = arith.addi %c0_i32_74, %c2_i32_75 : i32
    %c1_i32_76 = arith.constant 1 : i32
    %78:3 = scf.for %arg20 = %c0_i32_74 to %77 step %c1_i32_76 iter_args(%arg21 = %74, %arg22 = %75, %arg23 = %76) -> (vector<8x1xf32>, vector<8x1xf32>, vector<8x8xf32>)  : i32 {
      %c8_i32 = arith.constant 8 : i32
      %156 = arith.muli %arg20, %c8_i32 : i32
      %157 = tpu.assume_multiple %156, 8 : i32
      %c0_129 = arith.constant 0 : index
      %c3_130 = arith.constant 3 : index
      %158 = arith.index_cast %157 : i32 to index
      %c0_131 = arith.constant 0 : index
      %159 = vector.load %arg3[%c0_129, %c3_130, %158, %c0_131] : memref<1x4x16x8xf32, #tpu.memory_space<vmem>>, vector<1x1x8x8xf32>
      %160 = vector.shape_cast %159 : vector<1x1x8x8xf32> to vector<8x8xf32>
      %c0_132 = arith.constant 0 : index
      %c3_133 = arith.constant 3 : index
      %161 = arith.index_cast %157 : i32 to index
      %c0_134 = arith.constant 0 : index
      %162 = vector.load %arg4[%c0_132, %c3_133, %161, %c0_134] : memref<1x4x16x8xf32, #tpu.memory_space<vmem>>, vector<1x1x8x8xf32>
      %163 = vector.shape_cast %162 : vector<1x1x8x8xf32> to vector<8x8xf32>
      %cst_135 = arith.constant dense<0.000000e+00> : vector<8x8xf32>
      %164 = tpu.matmul %73, %160, %cst_135 {dimension_numbers = #tpu.dot_dimension_numbers<[1], [1], [0], [0], [0, 0, 1, 0], [], []>} : vector<8x8xf32>, vector<8x8xf32>, vector<8x8xf32> -> vector<8x8xf32>
      %cst_136 = arith.constant dense<0xFF800000> : vector<8xf32>
      %165 = vector.multi_reduction <maximumf>, %164, %cst_136 [1] : vector<8x8xf32> to vector<8xf32>
      %166 = vector.shape_cast %165 : vector<8xf32> to vector<8x1xf32>
      %167 = arith.maximumf %arg21, %166 : vector<8x1xf32>
      %168 = arith.subf %arg21, %167 : vector<8x1xf32>
      %169 = math.exp %168 : vector<8x1xf32>
      %170 = vector.broadcast %167 : vector<8x1xf32> to vector<8x8xf32>
      %171 = arith.subf %164, %170 : vector<8x8xf32>
      %172 = math.exp %171 : vector<8x8xf32>
      %173 = arith.mulf %169, %arg22 : vector<8x1xf32>
      %cst_137 = arith.constant dense<0.000000e+00> : vector<8xf32>
      %174 = vector.multi_reduction <add>, %172, %cst_137 [1] : vector<8x8xf32> to vector<8xf32>
      %175 = vector.shape_cast %174 : vector<8xf32> to vector<8x1xf32>
      %176 = arith.addf %173, %175 : vector<8x1xf32>
      %177 = vector.broadcast %169 : vector<8x1xf32> to vector<8x8xf32>
      %178 = arith.mulf %177, %arg23 : vector<8x8xf32>
      %cst_138 = arith.constant dense<0.000000e+00> : vector<8x8xf32>
      %179 = tpu.matmul %172, %163, %cst_138 {dimension_numbers = #tpu.dot_dimension_numbers<[1], [0], [0], [1], [0, 0, 1, 1], [], []>} : vector<8x8xf32>, vector<8x8xf32>, vector<8x8xf32> -> vector<8x8xf32>
      %180 = arith.addf %178, %179 : vector<8x8xf32>
      scf.yield %167, %176, %180 : vector<8x1xf32>, vector<8x1xf32>, vector<8x8xf32>
    }
    %c2_i32_77 = arith.constant 2 : i32
    %79 = tpu.reciprocal %78#1 {approx = true} : vector<8x1xf32> -> vector<8x1xf32>
    %80 = vector.broadcast %79 : vector<8x1xf32> to vector<8x8xf32>
    %81 = arith.mulf %78#2, %80 : vector<8x8xf32>
    %c0_78 = arith.constant 0 : index
    %c0_79 = arith.constant 0 : index
    %82 = vector.load %arg18[%c0_78, %c0_79] : memref<8x32xf32, #tpu.memory_space<vmem>>, vector<8x32xf32>
    %c3_80 = arith.constant 3 : index
    %c0_81 = arith.constant 0 : index
    %c0_82 = arith.constant 0 : index
    %83 = vector.load %arg7[%c3_80, %c0_81, %c0_82] : memref<4x8x32xf32, #tpu.memory_space<vmem>>, vector<1x8x32xf32>
    %84 = vector.shape_cast %83 : vector<1x8x32xf32> to vector<8x32xf32>
    %cst_83 = arith.constant dense<0.000000e+00> : vector<8x32xf32>
    %85 = tpu.matmul %81, %84, %cst_83 {dimension_numbers = #tpu.dot_dimension_numbers<[1], [0], [0], [1], [0, 0, 1, 1], [], []>} : vector<8x8xf32>, vector<8x32xf32>, vector<8x32xf32> -> vector<8x32xf32>
    %86 = arith.addf %82, %85 : vector<8x32xf32>
    %c0_84 = arith.constant 0 : index
    %c0_85 = arith.constant 0 : index
    %87 = vector.load %arg18[%c0_84, %c0_85] : memref<8x32xf32, #tpu.memory_space<vmem>>, vector<8x32xf32>
    tpu.vector_store %arg18[%c0_84, %c0_85], %86 {strides = array<i32>} : memref<8x32xf32, #tpu.memory_space<vmem>>, vector<8x32xf32>,
    %c0_86 = arith.constant 0 : index
    %c0_87 = arith.constant 0 : index
    %c0_88 = arith.constant 0 : index
    %88 = vector.load %arg2[%c0_86, %c0_87, %c0_88] : memref<1x8x32xf32, #tpu.memory_space<vmem>>, vector<1x8x32xf32>
    %89 = vector.shape_cast %88 : vector<1x8x32xf32> to vector<8x32xf32>
    %c0_89 = arith.constant 0 : index
    %c0_90 = arith.constant 0 : index
    %90 = vector.load %arg18[%c0_89, %c0_90] : memref<8x32xf32, #tpu.memory_space<vmem>>, vector<8x32xf32>
    %91 = arith.addf %89, %90 : vector<8x32xf32>
    %c0_91 = arith.constant 0 : index
    %c0_92 = arith.constant 0 : index
    %92 = vector.load %arg8[%c0_91, %c0_92] : memref<1x32xf32, #tpu.memory_space<vmem>>, vector<1x32xf32>
    %93 = vector.broadcast %92 : vector<1x32xf32> to vector<8x32xf32>
    %94 = arith.addf %91, %93 : vector<8x32xf32>
    %c0_93 = arith.constant 0 : index
    %c0_94 = arith.constant 0 : index
    %95 = vector.load %arg13[%c0_93, %c0_94] : memref<1x32xf32, #tpu.memory_space<vmem>>, vector<1x32xf32>
    %c0_95 = arith.constant 0 : index
    %c0_96 = arith.constant 0 : index
    %96 = vector.load %arg14[%c0_95, %c0_96] : memref<1x32xf32, #tpu.memory_space<vmem>>, vector<1x32xf32>
    %cst_97 = arith.constant dense<0.000000e+00> : vector<8xf32>
    %97 = vector.multi_reduction <add>, %94, %cst_97 [1] : vector<8x32xf32> to vector<8xf32>
    %98 = vector.shape_cast %97 : vector<8xf32> to vector<8x1xf32>
    %cst_98 = arith.constant 3.200000e+01 : f32
    %99 = vector.broadcast %cst_98 : f32 to vector<8x1xf32>
    %100 = arith.divf %98, %99 : vector<8x1xf32>
    %101 = vector.broadcast %100 : vector<8x1xf32> to vector<8x32xf32>
    %102 = arith.subf %94, %101 : vector<8x32xf32>
    %103 = arith.mulf %102, %102 : vector<8x32xf32>
    %cst_99 = arith.constant dense<0.000000e+00> : vector<8xf32>
    %104 = vector.multi_reduction <add>, %103, %cst_99 [1] : vector<8x32xf32> to vector<8xf32>
    %105 = vector.shape_cast %104 : vector<8xf32> to vector<8x1xf32>
    %cst_100 = arith.constant 3.200000e+01 : f32
    %106 = vector.broadcast %cst_100 : f32 to vector<8x1xf32>
    %107 = arith.divf %105, %106 : vector<8x1xf32>
    %108 = vector.broadcast %100 : vector<8x1xf32> to vector<8x32xf32>
    %109 = arith.subf %94, %108 : vector<8x32xf32>
    %cst_101 = arith.constant 9.99999974E-6 : f32
    %110 = vector.broadcast %cst_101 : f32 to vector<8x1xf32>
    %111 = arith.addf %107, %110 : vector<8x1xf32>
    %112 = math.rsqrt %111 : vector<8x1xf32>
    %113 = vector.broadcast %112 : vector<8x1xf32> to vector<8x32xf32>
    %114 = arith.mulf %109, %113 : vector<8x32xf32>
    %115 = vector.broadcast %95 : vector<1x32xf32> to vector<8x32xf32>
    %116 = arith.mulf %114, %115 : vector<8x32xf32>
    %117 = vector.broadcast %96 : vector<1x32xf32> to vector<8x32xf32>
    %118 = arith.addf %116, %117 : vector<8x32xf32>
    %c0_102 = arith.constant 0 : index
    %c0_103 = arith.constant 0 : index
    %119 = vector.load %arg19[%c0_102, %c0_103] : memref<8x32xf32, #tpu.memory_space<vmem>>, vector<8x32xf32>
    tpu.vector_store %arg19[%c0_102, %c0_103], %118 {strides = array<i32>} : memref<8x32xf32, #tpu.memory_space<vmem>>, vector<8x32xf32>,
    %cst_104 = arith.constant 0.000000e+00 : f32
    %120 = vector.broadcast %cst_104 : f32 to vector<8x32xf32>
    %c0_105 = arith.constant 0 : index
    %c0_106 = arith.constant 0 : index
    %121 = vector.load %arg18[%c0_105, %c0_106] : memref<8x32xf32, #tpu.memory_space<vmem>>, vector<8x32xf32>
    tpu.vector_store %arg18[%c0_105, %c0_106], %120 {strides = array<i32>} : memref<8x32xf32, #tpu.memory_space<vmem>>, vector<8x32xf32>,
    %c0_i32_107 = arith.constant 0 : i32
    %c2_i32_108 = arith.constant 2 : i32
    %122 = arith.addi %c0_i32_107, %c2_i32_108 : i32
    %c1_i32_109 = arith.constant 1 : i32
    scf.for %arg20 = %c0_i32_107 to %122 step %c1_i32_109  : i32 {
      %c1_i32_129 = arith.constant 1 : i32
      %156 = arith.muli %arg20, %c1_i32_129 : i32
      %c0_i32_130 = arith.constant 0 : i32
      %157 = arith.addi %c0_i32_130, %156 : i32
      %158 = arith.index_cast %157 : i32 to index
      %c0_131 = arith.constant 0 : index
      %c0_132 = arith.constant 0 : index
      %159 = vector.load %arg9[%158, %c0_131, %c0_132] : memref<2x32x32xf32, #tpu.memory_space<vmem>>, vector<1x32x32xf32>
      %160 = vector.shape_cast %159 : vector<1x32x32xf32> to vector<32x32xf32>
      %cst_133 = arith.constant dense<0.000000e+00> : vector<8x32xf32>
      %161 = tpu.matmul %118, %160, %cst_133 {dimension_numbers = #tpu.dot_dimension_numbers<[1], [0], [0], [1], [0, 0, 1, 1], [], []>} : vector<8x32xf32>, vector<32x32xf32>, vector<8x32xf32> -> vector<8x32xf32>
      %162 = arith.index_cast %157 : i32 to index
      %c0_134 = arith.constant 0 : index
      %c0_135 = arith.constant 0 : index
      %163 = vector.load %arg10[%162, %c0_134, %c0_135] : memref<2x1x32xf32, #tpu.memory_space<vmem>>, vector<1x1x32xf32>
      %164 = vector.shape_cast %163 : vector<1x1x32xf32> to vector<1x32xf32>
      %165 = vector.broadcast %164 : vector<1x32xf32> to vector<8x32xf32>
      %166 = arith.addf %161, %165 : vector<8x32xf32>
      %cst_136 = arith.constant 0.000000e+00 : f32
      %167 = vector.broadcast %cst_136 : f32 to vector<8x32xf32>
      %168 = arith.maximumf %166, %167 : vector<8x32xf32>
      %c0_137 = arith.constant 0 : index
      %c0_138 = arith.constant 0 : index
      %169 = vector.load %arg18[%c0_137, %c0_138] : memref<8x32xf32, #tpu.memory_space<vmem>>, vector<8x32xf32>
      %170 = arith.index_cast %157 : i32 to index
      %c0_139 = arith.constant 0 : index
      %c0_140 = arith.constant 0 : index
      %171 = vector.load %arg11[%170, %c0_139, %c0_140] : memref<2x32x32xf32, #tpu.memory_space<vmem>>, vector<1x32x32xf32>
      %172 = vector.shape_cast %171 : vector<1x32x32xf32> to vector<32x32xf32>
      %cst_141 = arith.constant dense<0.000000e+00> : vector<8x32xf32>
      %173 = tpu.matmul %168, %172, %cst_141 {dimension_numbers = #tpu.dot_dimension_numbers<[1], [0], [0], [1], [0, 0, 1, 1], [], []>} : vector<8x32xf32>, vector<32x32xf32>, vector<8x32xf32> -> vector<8x32xf32>
      %174 = arith.addf %169, %173 : vector<8x32xf32>
      %c0_142 = arith.constant 0 : index
      %c0_143 = arith.constant 0 : index
      %175 = vector.load %arg18[%c0_142, %c0_143] : memref<8x32xf32, #tpu.memory_space<vmem>>, vector<8x32xf32>
      tpu.vector_store %arg18[%c0_142, %c0_143], %174 {strides = array<i32>} : memref<8x32xf32, #tpu.memory_space<vmem>>, vector<8x32xf32>,
    }
    %c2_i32_110 = arith.constant 2 : i32
    %c0_111 = arith.constant 0 : index
    %c0_112 = arith.constant 0 : index
    %123 = vector.load %arg19[%c0_111, %c0_112] : memref<8x32xf32, #tpu.memory_space<vmem>>, vector<8x32xf32>
    %c0_113 = arith.constant 0 : index
    %c0_114 = arith.constant 0 : index
    %124 = vector.load %arg18[%c0_113, %c0_114] : memref<8x32xf32, #tpu.memory_space<vmem>>, vector<8x32xf32>
    %125 = arith.addf %123, %124 : vector<8x32xf32>
    %c0_115 = arith.constant 0 : index
    %c0_116 = arith.constant 0 : index
    %126 = vector.load %arg12[%c0_115, %c0_116] : memref<1x32xf32, #tpu.memory_space<vmem>>, vector<1x32xf32>
    %127 = vector.broadcast %126 : vector<1x32xf32> to vector<8x32xf32>
    %128 = arith.addf %125, %127 : vector<8x32xf32>
    %c0_117 = arith.constant 0 : index
    %c0_118 = arith.constant 0 : index
    %129 = vector.load %arg15[%c0_117, %c0_118] : memref<1x32xf32, #tpu.memory_space<vmem>>, vector<1x32xf32>
    %c0_119 = arith.constant 0 : index
    %c0_120 = arith.constant 0 : index
    %130 = vector.load %arg16[%c0_119, %c0_120] : memref<1x32xf32, #tpu.memory_space<vmem>>, vector<1x32xf32>
    %cst_121 = arith.constant dense<0.000000e+00> : vector<8xf32>
    %131 = vector.multi_reduction <add>, %128, %cst_121 [1] : vector<8x32xf32> to vector<8xf32>
    %132 = vector.shape_cast %131 : vector<8xf32> to vector<8x1xf32>
    %cst_122 = arith.constant 3.200000e+01 : f32
    %133 = vector.broadcast %cst_122 : f32 to vector<8x1xf32>
    %134 = arith.divf %132, %133 : vector<8x1xf32>
    %135 = vector.broadcast %134 : vector<8x1xf32> to vector<8x32xf32>
    %136 = arith.subf %128, %135 : vector<8x32xf32>
    %137 = arith.mulf %136, %136 : vector<8x32xf32>
    %cst_123 = arith.constant dense<0.000000e+00> : vector<8xf32>
    %138 = vector.multi_reduction <add>, %137, %cst_123 [1] : vector<8x32xf32> to vector<8xf32>
    %139 = vector.shape_cast %138 : vector<8xf32> to vector<8x1xf32>
    %cst_124 = arith.constant 3.200000e+01 : f32
    %140 = vector.broadcast %cst_124 : f32 to vector<8x1xf32>
    %141 = arith.divf %139, %140 : vector<8x1xf32>
    %142 = vector.broadcast %134 : vector<8x1xf32> to vector<8x32xf32>
    %143 = arith.subf %128, %142 : vector<8x32xf32>
    %cst_125 = arith.constant 9.99999974E-6 : f32
    %144 = vector.broadcast %cst_125 : f32 to vector<8x1xf32>
    %145 = arith.addf %141, %144 : vector<8x1xf32>
    %146 = math.rsqrt %145 : vector<8x1xf32>
    %147 = vector.broadcast %146 : vector<8x1xf32> to vector<8x32xf32>
    %148 = arith.mulf %143, %147 : vector<8x32xf32>
    %149 = vector.broadcast %129 : vector<1x32xf32> to vector<8x32xf32>
    %150 = arith.mulf %148, %149 : vector<8x32xf32>
    %151 = vector.broadcast %130 : vector<1x32xf32> to vector<8x32xf32>
    %152 = arith.addf %150, %151 : vector<8x32xf32>
    %c0_126 = arith.constant 0 : index
    %c0_127 = arith.constant 0 : index
    %c0_128 = arith.constant 0 : index
    %153 = vector.load %arg17[%c0_126, %c0_127, %c0_128] : memref<1x8x32xf32, #tpu.memory_space<vmem>>, vector<1x8x32xf32>
    %154 = vector.shape_cast %153 : vector<1x8x32xf32> to vector<8x32xf32>
    %155 = vector.shape_cast %152 : vector<8x32xf32> to vector<1x8x32xf32>
    tpu.vector_store %arg17[%c0_126, %c0_127, %c0_128], %155 {strides = array<i32>} : memref<1x8x32xf32, #tpu.memory_space<vmem>>, vector<1x8x32xf32>,
    return
  }
  func.func @transform_0(%arg0: i32, %arg1: i32) -> (i32, i32, i32) {
    %c0_i32 = arith.constant 0 : i32
    %c0_i32_0 = arith.constant 0 : i32
    return %arg0, %arg1, %c0_i32 : i32, i32, i32
  }
  func.func @transform_1(%arg0: i32, %arg1: i32) -> (i32, i32, i32, i32) {
    %c0_i32 = arith.constant 0 : i32
    %c0_i32_0 = arith.constant 0 : i32
    %c0_i32_1 = arith.constant 0 : i32
    %c0_i32_2 = arith.constant 0 : i32
    return %arg0, %c0_i32, %c0_i32_0, %c0_i32_1 : i32, i32, i32, i32
  }
  func.func @transform_2(%arg0: i32, %arg1: i32) -> (i32, i32, i32, i32) {
    %c0_i32 = arith.constant 0 : i32
    %c0_i32_0 = arith.constant 0 : i32
    %c0_i32_1 = arith.constant 0 : i32
    %c0_i32_2 = arith.constant 0 : i32
    return %arg0, %c0_i32, %c0_i32_0, %c0_i32_1 : i32, i32, i32, i32
  }
  func.func @transform_3(%arg0: i32, %arg1: i32) -> (i32, i32, i32) {
    %c0_i32 = arith.constant 0 : i32
    %c0_i32_0 = arith.constant 0 : i32
    %c0_i32_1 = arith.constant 0 : i32
    %c0_i32_2 = arith.constant 0 : i32
    return %c0_i32, %c0_i32_0, %c0_i32_1 : i32, i32, i32
  }
  func.func @transform_4(%arg0: i32, %arg1: i32) -> (i32, i32, i32) {
    %c0_i32 = arith.constant 0 : i32
    %c0_i32_0 = arith.constant 0 : i32
    %c0_i32_1 = arith.constant 0 : i32
    %c0_i32_2 = arith.constant 0 : i32
    return %c0_i32, %c0_i32_0, %c0_i32_1 : i32, i32, i32
  }
  func.func @transform_5(%arg0: i32, %arg1: i32) -> (i32, i32, i32) {
    %c0_i32 = arith.constant 0 : i32
    %c0_i32_0 = arith.constant 0 : i32
    %c0_i32_1 = arith.constant 0 : i32
    %c0_i32_2 = arith.constant 0 : i32
    return %c0_i32, %c0_i32_0, %c0_i32_1 : i32, i32, i32
  }
  func.func @transform_6(%arg0: i32, %arg1: i32) -> (i32, i32) {
    %c0_i32 = arith.constant 0 : i32
    %c0_i32_0 = arith.constant 0 : i32
    %c0_i32_1 = arith.constant 0 : i32
    return %c0_i32, %c0_i32_0 : i32, i32
  }
  func.func @transform_7(%arg0: i32, %arg1: i32) -> (i32, i32, i32) {
    %c0_i32 = arith.constant 0 : i32
    %c0_i32_0 = arith.constant 0 : i32
    %c0_i32_1 = arith.constant 0 : i32
    %c0_i32_2 = arith.constant 0 : i32
    return %c0_i32, %c0_i32_0, %c0_i32_1 : i32, i32, i32
  }
  func.func @transform_8(%arg0: i32, %arg1: i32) -> (i32, i32, i32) {
    %c0_i32 = arith.constant 0 : i32
    %c0_i32_0 = arith.constant 0 : i32
    %c0_i32_1 = arith.constant 0 : i32
    %c0_i32_2 = arith.constant 0 : i32
    return %c0_i32, %c0_i32_0, %c0_i32_1 : i32, i32, i32
  }
  func.func @transform_9(%arg0: i32, %arg1: i32) -> (i32, i32, i32) {
    %c0_i32 = arith.constant 0 : i32
    %c0_i32_0 = arith.constant 0 : i32
    %c0_i32_1 = arith.constant 0 : i32
    %c0_i32_2 = arith.constant 0 : i32
    return %c0_i32, %c0_i32_0, %c0_i32_1 : i32, i32, i32
  }
  func.func @transform_10(%arg0: i32, %arg1: i32) -> (i32, i32) {
    %c0_i32 = arith.constant 0 : i32
    %c0_i32_0 = arith.constant 0 : i32
    %c0_i32_1 = arith.constant 0 : i32
    return %c0_i32, %c0_i32_0 : i32, i32
  }
  func.func @transform_11(%arg0: i32, %arg1: i32) -> (i32, i32) {
    %c0_i32 = arith.constant 0 : i32
    %c0_i32_0 = arith.constant 0 : i32
    %c0_i32_1 = arith.constant 0 : i32
    return %c0_i32, %c0_i32_0 : i32, i32
  }
  func.func @transform_12(%arg0: i32, %arg1: i32) -> (i32, i32) {
    %c0_i32 = arith.constant 0 : i32
    %c0_i32_0 = arith.constant 0 : i32
    %c0_i32_1 = arith.constant 0 : i32
    return %c0_i32, %c0_i32_0 : i32, i32
  }
  func.func @transform_13(%arg0: i32, %arg1: i32) -> (i32, i32) {
    %c0_i32 = arith.constant 0 : i32
    %c0_i32_0 = arith.constant 0 : i32
    %c0_i32_1 = arith.constant 0 : i32
    return %c0_i32, %c0_i32_0 : i32, i32
  }
  func.func @transform_14(%arg0: i32, %arg1: i32) -> (i32, i32) {
    %c0_i32 = arith.constant 0 : i32
    %c0_i32_0 = arith.constant 0 : i32
    %c0_i32_1 = arith.constant 0 : i32
    return %c0_i32, %c0_i32_0 : i32, i32
  }
  func.func @transform_15(%arg0: i32, %arg1: i32) -> (i32, i32, i32) {
    %c0_i32 = arith.constant 0 : i32
    %c0_i32_0 = arith.constant 0 : i32
    return %arg0, %arg1, %c0_i32 : i32, i32, i32
  }
}

</mosaic_0001>

<llo_original>
// kernel: tpu_custom_call.1
$region0: #{tpu_custom_call.1}
  #allocation0 [shape = 'u32[]', space=smem, size = 0x4, offset = 0x4, fixed_abs, tag = 'smem constant byte address 0x4 - core index']
  #allocation1 [shape = 'u32[72,128]{1,0:T(1,128)}', space=vmem, size = 0x9000, scoped, tag = 'internal scratch']
  #allocation2 [shape = 'f32[8,32]{1,0:T(8,128)}', space=vmem, size = 0x1000, scoped, tag = 'scratch operand']
  #allocation3 [shape = 'f32[8,32]{1,0:T(8,128)}', space=vmem, size = 0x1000, scoped, tag = 'scratch operand']
  %s0 = inlined_call_operand.vmem [shape: f32[2,16,32], index: 0, kind: input, shape index: {}]
  %s1 = inlined_call_operand.vmem [shape: f32[2,4,16,8], index: 1, kind: input, shape index: {}]
  %s2 = inlined_call_operand.vmem [shape: f32[2,4,16,8], index: 2, kind: input, shape index: {}]
  %s3 = inlined_call_operand.vmem [shape: f32[4,32,8], index: 3, kind: input, shape index: {}]
  %s4 = inlined_call_operand.vmem [shape: f32[4,1,8], index: 4, kind: input, shape index: {}]
  %s5 = inlined_call_operand.vmem [shape: f32[4,8,32], index: 5, kind: input, shape index: {}]
  %s6 = inlined_call_operand.vmem [shape: f32[1,32], index: 6, kind: input, shape index: {}]
  %s7 = inlined_call_operand.vmem [shape: f32[2,32,32], index: 7, kind: input, shape index: {}]
  %s8 = inlined_call_operand.vmem [shape: f32[2,1,32], index: 8, kind: input, shape index: {}]
  %s9 = inlined_call_operand.vmem [shape: f32[2,32,32], index: 9, kind: input, shape index: {}]
  %s10 = inlined_call_operand.vmem [shape: f32[1,32], index: 10, kind: input, shape index: {}]
  %s11 = inlined_call_operand.vmem [shape: f32[1,32], index: 11, kind: input, shape index: {}]
  %s12 = inlined_call_operand.vmem [shape: f32[1,32], index: 12, kind: input, shape index: {}]
  %s13 = inlined_call_operand.vmem [shape: f32[1,32], index: 13, kind: input, shape index: {}]
  %s14 = inlined_call_operand.vmem [shape: f32[1,32], index: 14, kind: input, shape index: {}]
  %s15 = inlined_call_operand.hbm [shape: f32[2,16,32], index: 15, kind: output, shape index: {}]
  %s16 = sld [smem:[#allocation0]]
  $region128: #{tpu_custom_call.1} parent=0
    _
  %s18 = ssub.s32 1, %s16
  %s19 = scalar_select 0, %s18, %s16
  $region1: #{tpu_custom_call.1} parent=0
    #allocation4 [shape = 'u8[8192]{0}', space=vmem, size = 0x2000, scoped, tag = 'output window, operand 0']
    #allocation5 [shape = 's32[2]{0}', space=sflag, size = 0x8, scoped, tag = 'scoped memory for tpu_custom_call.1']
    %20 = vsyncpa [#allocation5], 0
    %s21 = scalar_lea.sflag [#allocation5], 1
    %22 = vsyncpa %s21, 0
    loop: start=0, step=1, limit=6
    $region2: #{tpu_custom_call.1} parent=1 // loop_pre_header
      _
    $region3: #{tpu_custom_call.1} parent=1 // loop_header
      %s24 = sphi 0, %s28
      %p25 = scmp.ge.s32.totalorder %s24, 6
      %s31 = sphi 0, %s43
      %s32 = sphi 0, %s39
      %s33 = sphi 0, %s31
      %s34 = sphi 0, %s32
      %s35 = sphi 0, %s33
      %s36 = sphi 0, %s34
      %s48 = sphi 0, %s50
      %s51 = sphi 0, %s48
      %s52 = sphi 0, %s51
      %s68 = sphi 0, %s52
      %s74 = sphi 0, %s76
      %s77 = sphi 0, %s74
      %s78 = sphi 0, %s77
      %s94 = sphi 0, %s78
      %s100 = sphi 0, %s102
      %s103 = sphi 0, %s100
      %s104 = sphi 0, %s103
      %s120 = sphi 0, %s104
      %s124 = sphi 0, %s124
      %s126 = sphi 0, %s124
      %s127 = sphi 0, %s126
      %s141 = sphi 0, %s127
      %s145 = sphi 0, %s145
      %s147 = sphi 0, %s145
      %s148 = sphi 0, %s147
      %s162 = sphi 0, %s148
      %s166 = sphi 0, %s166
      %s168 = sphi 0, %s166
      %s169 = sphi 0, %s168
      %s183 = sphi 0, %s169
      %s187 = sphi 0, %s187
      %s189 = sphi 0, %s187
      %s190 = sphi 0, %s189
      %s204 = sphi 0, %s190
      %s208 = sphi 0, %s208
      %s210 = sphi 0, %s208
      %s211 = sphi 0, %s210
      %s225 = sphi 0, %s211
      %s229 = sphi 0, %s229
      %s231 = sphi 0, %s229
      %s232 = sphi 0, %s231
      %s246 = sphi 0, %s232
      %s250 = sphi 0, %s250
      %s252 = sphi 0, %s250
      %s253 = sphi 0, %s252
      %s267 = sphi 0, %s253
      %s271 = sphi 0, %s271
      %s273 = sphi 0, %s271
      %s274 = sphi 0, %s273
      %s288 = sphi 0, %s274
      %s292 = sphi 0, %s292
      %s294 = sphi 0, %s292
      %s295 = sphi 0, %s294
      %s309 = sphi 0, %s295
      %s313 = sphi 0, %s313
      %s315 = sphi 0, %s313
      %s316 = sphi 0, %s315
      %s330 = sphi 0, %s316
      %s334 = sphi 0, %s334
      %s336 = sphi 0, %s334
      %s337 = sphi 0, %s336
      %s351 = sphi 0, %s337
      %s355 = sphi 0, %s355
      %s357 = sphi 0, %s355
      %s358 = sphi 0, %s357
      %s372 = sphi 0, %s358
      %s380 = sphi 0, %s382
      %s383 = sphi 0, %s380
      %s384 = sphi 0, %s383
      %s400 = sphi 0, %s384
    $region4: #{tpu_custom_call.1} parent=1 // loop_header_branch
      %27 = sbr.rel (%p25) target = $region8
    $region5: #{tpu_custom_call.1} parent=1 // loop_body
      %s29 = ssub.s32 %s24, 1
      %s30 = ssub.s32 %s24, 2
      %s37 = sadd.s32 1, %s32
      %p38 = scmp.ge.s32.totalorder %s37, 2
      %s39 = scalar_select %p38, 0, %s37
      %s40 = sadd.s32 1, %s31
      %s41 = scalar_select %p38, %s40, %s31
      %p42 = scmp.ge.s32.totalorder %s41, 2
      %s43 = scalar_select %p42, 0, %s41
      %s44 = ssub.s32 %s31, %s43
      %s45 = ssub.s32 %s32, %s39
      %s46 = sor.u32 %s44, %s45
      %p47 = scmp.eq.s32.totalorder %s46, 0
      %s49 = sadd.s32 %s48, 1
      %s50 = scalar_select %p47, %s48, %s49
      %p53 = pneg %p47
      %p54 = scmp.eq.s32.totalorder %s24, 3
      %p55 = por %p53, %p54
      %p56 = scmp.ne.s32.totalorder %s48, %s51
      %p57 = scmp.eq.s32.totalorder %s24, 0
      %p58 = por %p56, %p57
      %p59 = scmp.ne.s32.totalorder %s48, %s51
      %p60 = scmp.eq.s32.totalorder %s29, 3
      %p61 = por %p59, %p60
      %p62 = scmp.ne.s32.totalorder %s51, %s52
      %p63 = scmp.eq.s32.totalorder %s29, 0
      %p64 = por %p62, %p63
      %p65 = scmp.ne.s32.totalorder %s51, %s52
      %p66 = scmp.eq.s32.totalorder %s30, 3
      %p67 = por %p65, %p66
      %p69 = scmp.ne.s32.totalorder %s52, %s68
      %p70 = scmp.eq.s32.totalorder %s30, 0
      %p71 = por %p69, %p70
      %s72 = ssub.s32 %s31, %s43
      %p73 = scmp.eq.s32.totalorder %s72, 0
      %s75 = sadd.s32 %s74, 1
      %s76 = scalar_select %p73, %s74, %s75
      %p79 = pneg %p73
      %p80 = scmp.eq.s32.totalorder %s24, 3
      %p81 = por %p79, %p80
      %p82 = scmp.ne.s32.totalorder %s74, %s77
      %p83 = scmp.eq.s32.totalorder %s24, 0
      %p84 = por %p82, %p83
      %p85 = scmp.ne.s32.totalorder %s74, %s77
      %p86 = scmp.eq.s32.totalorder %s29, 3
      %p87 = por %p85, %p86
      %p88 = scmp.ne.s32.totalorder %s77, %s78
      %p89 = scmp.eq.s32.totalorder %s29, 0
      %p90 = por %p88, %p89
      %p91 = scmp.ne.s32.totalorder %s77, %s78
      %p92 = scmp.eq.s32.totalorder %s30, 3
      %p93 = por %p91, %p92
      %p95 = scmp.ne.s32.totalorder %s78, %s94
      %p96 = scmp.eq.s32.totalorder %s30, 0
      %p97 = por %p95, %p96
      %s98 = ssub.s32 %s31, %s43
      %p99 = scmp.eq.s32.totalorder %s98, 0
      %s101 = sadd.s32 %s100, 1
      %s102 = scalar_select %p99, %s100, %s101
      %p105 = pneg %p99
      %p106 = scmp.eq.s32.totalorder %s24, 3
      %p107 = por %p105, %p106
      %p108 = scmp.ne.s32.totalorder %s100, %s103
      %p109 = scmp.eq.s32.totalorder %s24, 0
      %p110 = por %p108, %p109
      %p111 = scmp.ne.s32.totalorder %s100, %s103
      %p112 = scmp.eq.s32.totalorder %s29, 3
      %p113 = por %p111, %p112
      %p114 = scmp.ne.s32.totalorder %s103, %s104
      %p115 = scmp.eq.s32.totalorder %s29, 0
      %p116 = por %p114, %p115
      %p117 = scmp.ne.s32.totalorder %s103, %s104
      %p118 = scmp.eq.s32.totalorder %s30, 3
      %p119 = por %p117, %p118
      %p121 = scmp.ne.s32.totalorder %s104, %s120
      %p122 = scmp.eq.s32.totalorder %s30, 0
      %p123 = por %p121, %p122
      %s125 = sadd.s32 %s124, 1
      %p128 = scmp.eq.s32.totalorder %s24, 3
      %p129 = scmp.ne.s32.totalorder %s124, %s126
      %p130 = scmp.eq.s32.totalorder %s24, 0
      %p131 = por %p129, %p130
      %p132 = scmp.ne.s32.totalorder %s124, %s126
      %p133 = scmp.eq.s32.totalorder %s29, 3
      %p134 = por %p132, %p133
      %p135 = scmp.ne.s32.totalorder %s126, %s127
      %p136 = scmp.eq.s32.totalorder %s29, 0
      %p137 = por %p135, %p136
      %p138 = scmp.ne.s32.totalorder %s126, %s127
      %p139 = scmp.eq.s32.totalorder %s30, 3
      %p140 = por %p138, %p139
      %p142 = scmp.ne.s32.totalorder %s127, %s141
      %p143 = scmp.eq.s32.totalorder %s30, 0
      %p144 = por %p142, %p143
      %s146 = sadd.s32 %s145, 1
      %p149 = scmp.eq.s32.totalorder %s24, 3
      %p150 = scmp.ne.s32.totalorder %s145, %s147
      %p151 = scmp.eq.s32.totalorder %s24, 0
      %p152 = por %p150, %p151
      %p153 = scmp.ne.s32.totalorder %s145, %s147
      %p154 = scmp.eq.s32.totalorder %s29, 3
      %p155 = por %p153, %p154
      %p156 = scmp.ne.s32.totalorder %s147, %s148
      %p157 = scmp.eq.s32.totalorder %s29, 0
      %p158 = por %p156, %p157
      %p159 = scmp.ne.s32.totalorder %s147, %s148
      %p160 = scmp.eq.s32.totalorder %s30, 3
      %p161 = por %p159, %p160
      %p163 = scmp.ne.s32.totalorder %s148, %s162
      %p164 = scmp.eq.s32.totalorder %s30, 0
      %p165 = por %p163, %p164
      %s167 = sadd.s32 %s166, 1
      %p170 = scmp.eq.s32.totalorder %s24, 3
      %p171 = scmp.ne.s32.totalorder %s166, %s168
      %p172 = scmp.eq.s32.totalorder %s24, 0
      %p173 = por %p171, %p172
      %p174 = scmp.ne.s32.totalorder %s166, %s168
      %p175 = scmp.eq.s32.totalorder %s29, 3
      %p176 = por %p174, %p175
      %p177 = scmp.ne.s32.totalorder %s168, %s169
      %p178 = scmp.eq.s32.totalorder %s29, 0
      %p179 = por %p177, %p178
      %p180 = scmp.ne.s32.totalorder %s168, %s169
      %p181 = scmp.eq.s32.totalorder %s30, 3
      %p182 = por %p180, %p181
      %p184 = scmp.ne.s32.totalorder %s169, %s183
      %p185 = scmp.eq.s32.totalorder %s30, 0
      %p186 = por %p184, %p185
      %s188 = sadd.s32 %s187, 1
      %p191 = scmp.eq.s32.totalorder %s24, 3
      %p192 = scmp.ne.s32.totalorder %s187, %s189
      %p193 = scmp.eq.s32.totalorder %s24, 0
      %p194 = por %p192, %p193
      %p195 = scmp.ne.s32.totalorder %s187, %s189
      %p196 = scmp.eq.s32.totalorder %s29, 3
      %p197 = por %p195, %p196
      %p198 = scmp.ne.s32.totalorder %s189, %s190
      %p199 = scmp.eq.s32.totalorder %s29, 0
      %p200 = por %p198, %p199
      %p201 = scmp.ne.s32.totalorder %s189, %s190
      %p202 = scmp.eq.s32.totalorder %s30, 3
      %p203 = por %p201, %p202
      %p205 = scmp.ne.s32.totalorder %s190, %s204
      %p206 = scmp.eq.s32.totalorder %s30, 0
      %p207 = por %p205, %p206
      %s209 = sadd.s32 %s208, 1
      %p212 = scmp.eq.s32.totalorder %s24, 3
      %p213 = scmp.ne.s32.totalorder %s208, %s210
      %p214 = scmp.eq.s32.totalorder %s24, 0
      %p215 = por %p213, %p214
      %p216 = scmp.ne.s32.totalorder %s208, %s210
      %p217 = scmp.eq.s32.totalorder %s29, 3
      %p218 = por %p216, %p217
      %p219 = scmp.ne.s32.totalorder %s210, %s211
      %p220 = scmp.eq.s32.totalorder %s29, 0
      %p221 = por %p219, %p220
      %p222 = scmp.ne.s32.totalorder %s210, %s211
      %p223 = scmp.eq.s32.totalorder %s30, 3
      %p224 = por %p222, %p223
      %p226 = scmp.ne.s32.totalorder %s211, %s225
      %p227 = scmp.eq.s32.totalorder %s30, 0
      %p228 = por %p226, %p227
      %s230 = sadd.s32 %s229, 1
      %p233 = scmp.eq.s32.totalorder %s24, 3
      %p234 = scmp.ne.s32.totalorder %s229, %s231
      %p235 = scmp.eq.s32.totalorder %s24, 0
      %p236 = por %p234, %p235
      %p237 = scmp.ne.s32.totalorder %s229, %s231
      %p238 = scmp.eq.s32.totalorder %s29, 3
      %p239 = por %p237, %p238
      %p240 = scmp.ne.s32.totalorder %s231, %s232
      %p241 = scmp.eq.s32.totalorder %s29, 0
      %p242 = por %p240, %p241
      %p243 = scmp.ne.s32.totalorder %s231, %s232
      %p244 = scmp.eq.s32.totalorder %s30, 3
      %p245 = por %p243, %p244
      %p247 = scmp.ne.s32.totalorder %s232, %s246
      %p248 = scmp.eq.s32.totalorder %s30, 0
      %p249 = por %p247, %p248
      %s251 = sadd.s32 %s250, 1
      %p254 = scmp.eq.s32.totalorder %s24, 3
      %p255 = scmp.ne.s32.totalorder %s250, %s252
      %p256 = scmp.eq.s32.totalorder %s24, 0
      %p257 = por %p255, %p256
      %p258 = scmp.ne.s32.totalorder %s250, %s252
      %p259 = scmp.eq.s32.totalorder %s29, 3
      %p260 = por %p258, %p259
      %p261 = scmp.ne.s32.totalorder %s252, %s253
      %p262 = scmp.eq.s32.totalorder %s29, 0
      %p263 = por %p261, %p262
      %p264 = scmp.ne.s32.totalorder %s252, %s253
      %p265 = scmp.eq.s32.totalorder %s30, 3
      %p266 = por %p264, %p265
      %p268 = scmp.ne.s32.totalorder %s253, %s267
      %p269 = scmp.eq.s32.totalorder %s30, 0
      %p270 = por %p268, %p269
      %s272 = sadd.s32 %s271, 1
      %p275 = scmp.eq.s32.totalorder %s24, 3
      %p276 = scmp.ne.s32.totalorder %s271, %s273
      %p277 = scmp.eq.s32.totalorder %s24, 0
      %p278 = por %p276, %p277
      %p279 = scmp.ne.s32.totalorder %s271, %s273
      %p280 = scmp.eq.s32.totalorder %s29, 3
      %p281 = por %p279, %p280
      %p282 = scmp.ne.s32.totalorder %s273, %s274
      %p283 = scmp.eq.s32.totalorder %s29, 0
      %p284 = por %p282, %p283
      %p285 = scmp.ne.s32.totalorder %s273, %s274
      %p286 = scmp.eq.s32.totalorder %s30, 3
      %p287 = por %p285, %p286
      %p289 = scmp.ne.s32.totalorder %s274, %s288
      %p290 = scmp.eq.s32.totalorder %s30, 0
      %p291 = por %p289, %p290
      %s293 = sadd.s32 %s292, 1
      %p296 = scmp.eq.s32.totalorder %s24, 3
      %p297 = scmp.ne.s32.totalorder %s292, %s294
      %p298 = scmp.eq.s32.totalorder %s24, 0
      %p299 = por %p297, %p298
      %p300 = scmp.ne.s32.totalorder %s292, %s294
      %p301 = scmp.eq.s32.totalorder %s29, 3
      %p302 = por %p300, %p301
      %p303 = scmp.ne.s32.totalorder %s294, %s295
      %p304 = scmp.eq.s32.totalorder %s29, 0
      %p305 = por %p303, %p304
      %p306 = scmp.ne.s32.totalorder %s294, %s295
      %p307 = scmp.eq.s32.totalorder %s30, 3
      %p308 = por %p306, %p307
      %p310 = scmp.ne.s32.totalorder %s295, %s309
      %p311 = scmp.eq.s32.totalorder %s30, 0
      %p312 = por %p310, %p311
      %s314 = sadd.s32 %s313, 1
      %p317 = scmp.eq.s32.totalorder %s24, 3
      %p318 = scmp.ne.s32.totalorder %s313, %s315
      %p319 = scmp.eq.s32.totalorder %s24, 0
      %p320 = por %p318, %p319
      %p321 = scmp.ne.s32.totalorder %s313, %s315
      %p322 = scmp.eq.s32.totalorder %s29, 3
      %p323 = por %p321, %p322
      %p324 = scmp.ne.s32.totalorder %s315, %s316
      %p325 = scmp.eq.s32.totalorder %s29, 0
      %p326 = por %p324, %p325
      %p327 = scmp.ne.s32.totalorder %s315, %s316
      %p328 = scmp.eq.s32.totalorder %s30, 3
      %p329 = por %p327, %p328
      %p331 = scmp.ne.s32.totalorder %s316, %s330
      %p332 = scmp.eq.s32.totalorder %s30, 0
      %p333 = por %p331, %p332
      %s335 = sadd.s32 %s334, 1
      %p338 = scmp.eq.s32.totalorder %s24, 3
      %p339 = scmp.ne.s32.totalorder %s334, %s336
      %p340 = scmp.eq.s32.totalorder %s24, 0
      %p341 = por %p339, %p340
      %p342 = scmp.ne.s32.totalorder %s334, %s336
      %p343 = scmp.eq.s32.totalorder %s29, 3
      %p344 = por %p342, %p343
      %p345 = scmp.ne.s32.totalorder %s336, %s337
      %p346 = scmp.eq.s32.totalorder %s29, 0
      %p347 = por %p345, %p346
      %p348 = scmp.ne.s32.totalorder %s336, %s337
      %p349 = scmp.eq.s32.totalorder %s30, 3
      %p350 = por %p348, %p349
      %p352 = scmp.ne.s32.totalorder %s337, %s351
      %p353 = scmp.eq.s32.totalorder %s30, 0
      %p354 = por %p352, %p353
      %s356 = sadd.s32 %s355, 1
      %p359 = scmp.eq.s32.totalorder %s24, 3
      %p360 = scmp.ne.s32.totalorder %s355, %s357
      %p361 = scmp.eq.s32.totalorder %s24, 0
      %p362 = por %p360, %p361
      %p363 = scmp.ne.s32.totalorder %s355, %s357
      %p364 = scmp.eq.s32.totalorder %s29, 3
      %p365 = por %p363, %p364
      %p366 = scmp.ne.s32.totalorder %s357, %s358
      %p367 = scmp.eq.s32.totalorder %s29, 0
      %p368 = por %p366, %p367
      %p369 = scmp.ne.s32.totalorder %s357, %s358
      %p370 = scmp.eq.s32.totalorder %s30, 3
      %p371 = por %p369, %p370
      %p373 = scmp.ne.s32.totalorder %s358, %s372
      %p374 = scmp.eq.s32.totalorder %s30, 0
      %p375 = por %p373, %p374
      %s376 = ssub.s32 %s31, %s43
      %s377 = ssub.s32 %s32, %s39
      %s378 = sor.u32 %s376, %s377
      %p379 = scmp.eq.s32.totalorder %s378, 0
      %s381 = sadd.s32 %s380, 1
      %s382 = scalar_select %p379, %s380, %s381
      %p385 = pneg %p379
      %p386 = scmp.eq.s32.totalorder %s24, 3
      %p387 = por %p385, %p386
      %p388 = scmp.ne.s32.totalorder %s380, %s383
      %p389 = scmp.eq.s32.totalorder %s24, 0
      %p390 = por %p388, %p389
      %p391 = scmp.ne.s32.totalorder %s380, %s383
      %p392 = scmp.eq.s32.totalorder %s29, 3
      %p393 = por %p391, %p392
      %p394 = scmp.ne.s32.totalorder %s383, %s384
      %p395 = scmp.eq.s32.totalorder %s29, 0
      %p396 = por %p394, %p395
      %p397 = scmp.ne.s32.totalorder %s383, %s384
      %p398 = scmp.eq.s32.totalorder %s30, 3
      %p399 = por %p397, %p398
      %p401 = scmp.ne.s32.totalorder %s384, %s400
      %p402 = scmp.eq.s32.totalorder %s30, 0
      %p403 = por %p401, %p402
      %p404 = scmp.le.s32.totalorder 1, %s24
      %p405 = scmp.lt.s32.totalorder %s24, 5
      %p406 = pnand %p404, %p405
      %p407 = pneg %p406
      // Predicated region
      $region9: #{tpu_custom_call.1} parent=5 // pred_check
        _
      $region10: #{tpu_custom_call.1} parent=5 // pred_check_branch
        %409 = sbr.rel (%p406) target = $region12
      $region11: #{tpu_custom_call.1} parent=5 // pred_region
        %s410 = ssub.s32 %s24, 1
        // Predicated region
        $region13: #{tpu_custom_call.1} parent=11 // pred_check
          %p411 = pneg %p137
        $region14: #{tpu_custom_call.1} parent=11 // pred_check_branch
          %413 = sbr.rel (%p411) target = $region16
        $region15: #{tpu_custom_call.1} parent=11 // pred_region
          _
        $region16: #{tpu_custom_call.1} parent=11 // pred_fallthru
          _
        // Predicated region
        $region17: #{tpu_custom_call.1} parent=11 // pred_check
          %p414 = pneg %p158
        $region18: #{tpu_custom_call.1} parent=11 // pred_check_branch
          %416 = sbr.rel (%p414) target = $region20
        $region19: #{tpu_custom_call.1} parent=11 // pred_region
          _
        $region20: #{tpu_custom_call.1} parent=11 // pred_fallthru
          _
        // Predicated region
        $region21: #{tpu_custom_call.1} parent=11 // pred_check
          %p417 = pneg %p179
        $region22: #{tpu_custom_call.1} parent=11 // pred_check_branch
          %419 = sbr.rel (%p417) target = $region24
        $region23: #{tpu_custom_call.1} parent=11 // pred_region
          _
        $region24: #{tpu_custom_call.1} parent=11 // pred_fallthru
          _
        // Predicated region
        $region25: #{tpu_custom_call.1} parent=11 // pred_check
          %p420 = pneg %p200
        $region26: #{tpu_custom_call.1} parent=11 // pred_check_branch
          %422 = sbr.rel (%p420) target = $region28
        $region27: #{tpu_custom_call.1} parent=11 // pred_region
          _
        $region28: #{tpu_custom_call.1} parent=11 // pred_fallthru
          _
        // Predicated region
        $region29: #{tpu_custom_call.1} parent=11 // pred_check
          %p423 = pneg %p221
        $region30: #{tpu_custom_call.1} parent=11 // pred_check_branch
          %425 = sbr.rel (%p423) target = $region32
        $region31: #{tpu_custom_call.1} parent=11 // pred_region
          _
        $region32: #{tpu_custom_call.1} parent=11 // pred_fallthru
          _
        // Predicated region
        $region33: #{tpu_custom_call.1} parent=11 // pred_check
          %p426 = pneg %p242
        $region34: #{tpu_custom_call.1} parent=11 // pred_check_branch
          %428 = sbr.rel (%p426) target = $region36
        $region35: #{tpu_custom_call.1} parent=11 // pred_region
          _
        $region36: #{tpu_custom_call.1} parent=11 // pred_fallthru
          _
        // Predicated region
        $region37: #{tpu_custom_call.1} parent=11 // pred_check
          %p429 = pneg %p263
        $region38: #{tpu_custom_call.1} parent=11 // pred_check_branch
          %431 = sbr.rel (%p429) target = $region40
        $region39: #{tpu_custom_call.1} parent=11 // pred_region
          _
        $region40: #{tpu_custom_call.1} parent=11 // pred_fallthru
          _
        // Predicated region
        $region41: #{tpu_custom_call.1} parent=11 // pred_check
          %p432 = pneg %p284
        $region42: #{tpu_custom_call.1} parent=11 // pred_check_branch
          %434 = sbr.rel (%p432) target = $region44
        $region43: #{tpu_custom_call.1} parent=11 // pred_region
          _
        $region44: #{tpu_custom_call.1} parent=11 // pred_fallthru
          _
        // Predicated region
        $region45: #{tpu_custom_call.1} parent=11 // pred_check
          %p435 = pneg %p305
        $region46: #{tpu_custom_call.1} parent=11 // pred_check_branch
          %437 = sbr.rel (%p435) target = $region48
        $region47: #{tpu_custom_call.1} parent=11 // pred_region
          _
        $region48: #{tpu_custom_call.1} parent=11 // pred_fallthru
          _
        // Predicated region
        $region49: #{tpu_custom_call.1} parent=11 // pred_check
          %p438 = pneg %p326
        $region50: #{tpu_custom_call.1} parent=11 // pred_check_branch
          %440 = sbr.rel (%p438) target = $region52
        $region51: #{tpu_custom_call.1} parent=11 // pred_region
          _
        $region52: #{tpu_custom_call.1} parent=11 // pred_fallthru
          _
        // Predicated region
        $region53: #{tpu_custom_call.1} parent=11 // pred_check
          %p441 = pneg %p347
        $region54: #{tpu_custom_call.1} parent=11 // pred_check_branch
          %443 = sbr.rel (%p441) target = $region56
        $region55: #{tpu_custom_call.1} parent=11 // pred_region
          _
        $region56: #{tpu_custom_call.1} parent=11 // pred_fallthru
          _
        // Predicated region
        $region57: #{tpu_custom_call.1} parent=11 // pred_check
          %p444 = pneg %p368
        $region58: #{tpu_custom_call.1} parent=11 // pred_check_branch
          %446 = sbr.rel (%p444) target = $region60
        $region59: #{tpu_custom_call.1} parent=11 // pred_region
          _
        $region60: #{tpu_custom_call.1} parent=11 // pred_fallthru
          _
      $region12: #{tpu_custom_call.1} parent=5 // pred_fallthru
        _
      %p447 = scmp.lt.s32.totalorder %s24, 4
      // Predicated region
      $region61: #{tpu_custom_call.1} parent=5 // pred_check
        %p448 = pneg %p447
      $region62: #{tpu_custom_call.1} parent=5 // pred_check_branch
        %450 = sbr.rel (%p448) target = $region64
      $region63: #{tpu_custom_call.1} parent=5 // pred_region
        // Predicated region
        $region65: #{tpu_custom_call.1} parent=63 // pred_check
          %p451 = pneg %p58
        $region66: #{tpu_custom_call.1} parent=63 // pred_check_branch
          %453 = sbr.rel (%p451) target = $region68
        $region67: #{tpu_custom_call.1} parent=63 // pred_region
          %p454 = scmp.lt.s32.totalorder %s31, 1
          %s455 = scalar_select %p454, %s31, 1
          %p456 = scmp.lt.s32.totalorder %s32, 1
          %s457 = scalar_select %p456, %s32, 1
          %s458 = smul.addr %s455, 2
          %s459 = sadd.s32 %s457, %s458
          %s460 = smul.addr %s459, 8
          %s461 = scalar_lea.vmem %s0, %s460
        $region68: #{tpu_custom_call.1} parent=63 // pred_fallthru
          _
        // Predicated region
        $region69: #{tpu_custom_call.1} parent=63 // pred_check
          %p462 = pneg %p84
        $region70: #{tpu_custom_call.1} parent=63 // pred_check_branch
          %464 = sbr.rel (%p462) target = $region72
        $region71: #{tpu_custom_call.1} parent=63 // pred_region
          %p465 = scmp.lt.s32.totalorder %s31, 1
          %s466 = scalar_select %p465, %s31, 1
          %s467 = smul.addr %s466, 8
          %s468 = smul.addr %s467, 8
          %s469 = scalar_lea.vmem %s1, %s468
        $region72: #{tpu_custom_call.1} parent=63 // pred_fallthru
          _
        // Predicated region
        $region73: #{tpu_custom_call.1} parent=63 // pred_check
          %p470 = pneg %p110
        $region74: #{tpu_custom_call.1} parent=63 // pred_check_branch
          %472 = sbr.rel (%p470) target = $region76
        $region75: #{tpu_custom_call.1} parent=63 // pred_region
          %p473 = scmp.lt.s32.totalorder %s31, 1
          %s474 = scalar_select %p473, %s31, 1
          %s475 = smul.addr %s474, 8
          %s476 = smul.addr %s475, 8
          %s477 = scalar_lea.vmem %s2, %s476
        $region76: #{tpu_custom_call.1} parent=63 // pred_fallthru
          _
      $region64: #{tpu_custom_call.1} parent=5 // pred_fallthru
        _
      %p478 = scmp.le.s32.totalorder 1, %s24
      %p479 = scmp.lt.s32.totalorder %s24, 5
      %p480 = pnand %p478, %p479
      %p481 = pneg %p480
      // Predicated region
      $region77: #{tpu_custom_call.1} parent=5 // pred_check
        _
      $region78: #{tpu_custom_call.1} parent=5 // pred_check_branch
        %483 = sbr.rel (%p480) target = $region80
      $region79: #{tpu_custom_call.1} parent=5 // pred_region
        %s484 = ssub.s32 %s24, 1
        %p485 = scmp.lt.s32.totalorder %s33, 1
        %s486 = scalar_select %p485, %s33, 1
        %p487 = scmp.lt.s32.totalorder %s34, 1
        %s488 = scalar_select %p487, %s34, 1
        %s489 = smul.addr %s486, 2
        %s490 = sadd.s32 %s488, %s489
        %s491 = smul.addr %s490, 8
        %s492 = scalar_lea.vmem %s0, %s491
        %p493 = pneg %p64
        %p494 = pneg %p61
        %p495 = scmp.lt.s32.totalorder %s33, 1
        %s496 = scalar_select %p495, %s33, 1
        %s497 = smul.addr %s496, 8
        %s498 = smul.addr %s497, 8
        %s499 = scalar_lea.vmem %s1, %s498
        %p500 = pneg %p90
        %p501 = pneg %p87
        %p502 = scmp.lt.s32.totalorder %s33, 1
        %s503 = scalar_select %p502, %s33, 1
        %s504 = smul.addr %s503, 8
        %s505 = smul.addr %s504, 8
        %s506 = scalar_lea.vmem %s2, %s505
        %p507 = pneg %p116
        %p508 = pneg %p113
        %p509 = pneg %p137
        %p510 = pneg %p134
        %p511 = pneg %p158
        %p512 = pneg %p155
        %p513 = pneg %p179
        %p514 = pneg %p176
        %p515 = pneg %p200
        %p516 = pneg %p197
        %p517 = pneg %p221
        %p518 = pneg %p218
        %p519 = pneg %p242
        %p520 = pneg %p239
        %p521 = pneg %p263
        %p522 = pneg %p260
        %p523 = pneg %p284
        %p524 = pneg %p281
        %p525 = pneg %p305
        %p526 = pneg %p302
        %p527 = pneg %p326
        %p528 = pneg %p323
        %p529 = pneg %p347
        %p530 = pneg %p344
        %p531 = pneg %p368
        %p532 = pneg %p365
        %p533 = pneg %p396
        %p534 = pneg %p393
        %s535 = sand.u32 %s383, 1
        %s536 = scalar_lea.sflag [#allocation5], %s535
        %s537 = sand.u32 %s383, 1
        %s538 = smul.addr %s537, 8
        %s539 = scalar_lea.vmem [#allocation4], %s538
        %p540 = scmp.lt.s32.totalorder %s33, 1
        %s541 = scalar_select %p540, %s33, 1
        %p542 = scmp.lt.s32.totalorder %s34, 1
        %s543 = scalar_select %p542, %s34, 1
        %s544 = smul.addr %s541, 2
        %s545 = sadd.s32 %s543, %s544
        %s546 = smul.addr %s545, 8
        %s547 = scalar_lea.vmem %s0, %s546
        %p548 = scmp.lt.s32.totalorder %s33, 1
        %s549 = scalar_select %p548, %s33, 1
        %s550 = smul.addr %s549, 8
        %s551 = smul.addr %s550, 8
        %s552 = scalar_lea.vmem %s1, %s551
        %p553 = scmp.lt.s32.totalorder %s33, 1
        %s554 = scalar_select %p553, %s33, 1
        %s555 = smul.addr %s554, 8
        %s556 = smul.addr %s555, 8
        %s557 = scalar_lea.vmem %s2, %s556
        %v558 = vld [vmem:[%s547] sm:$0xff]
        %vm559 = vcmask 261120
        %560 = vst.msk [vmem:[#allocation2] sm:$0xff] %vm559, 0.0
        %v561 = vld [vmem:[%s3] sm:$0xff]
        %v562 = vld [vmem:[%s3 + $0x8] sm:$0xff]
        %v563 = vld [vmem:[%s3 + $0x10] sm:$0xff]
        %v564 = vld [vmem:[%s3 + $0x18] sm:$0xff]
        %v565 = vld [vmem:[%s4] sm:$0x1]
        %v567 = vperm.slane %v565, 0
        %v570 = vsel %vm559, %v558, 0
        %572 = vmatpush.msra.mxu0 0.0
        %573 = vmatpush.msra.mxu0 0.0
        %574 = vmatpush.msra.mxu0 0.0
        %575 = vmatpush.msra.mxu0 0.0
        %576 = vmatpush.msra.mxu0 0.0
        %577 = vmatpush.msra.mxu0 0.0
        %578 = vmatpush.msra.mxu0 0.0
        %579 = vmatpush.msra.mxu0 0.0
        %580 = vmatpush.msra.mxu0 0.0
        %581 = vmatpush.msra.mxu0 0.0
        %582 = vmatpush.msra.mxu0 0.0
        %583 = vmatpush.msra.mxu0 0.0
        %584 = vmatpush.msra.mxu0 %v564
        %585 = vmatpush.msra.mxu0 %v563
        %586 = vmatpush.msra.mxu0 %v562
        %587 = vmatpush.msra.mxu0 %v561
        %588 = vmatmul.f32.gmra.mxu0 %v570
        %v589 = vpop.f32.mrf.mxu0
        %v590 = vadd.f32 %v567, %v589
        %591 = vdwg.mxu0
        loop: start=0, step=1, limit=2
        $region81: #{tpu_custom_call.1} parent=79 // loop_pre_header
          _
        $region82: #{tpu_custom_call.1} parent=79 // loop_header
          %s593 = sphi 0, %s597
          %p594 = scmp.ge.s32.totalorder %s593, 2
          %v598 = vphi -1e+30, %v636
          %v599 = vphi 0.0, %v647
          %v600 = vphi 0.0, %v672
        $region83: #{tpu_custom_call.1} parent=79 // loop_header_branch
          %596 = sbr.rel (%p594) target = $region87
        $region84: #{tpu_custom_call.1} parent=79 // loop_body
          %s601 = smul.u32 %s593, 8
          %s602 = scalar_lea.vmem %s552, %s601
          %v603 = vld [vmem:[%s602] sm:$0xff]
          %s604 = scalar_lea.vmem %s557, %s601
          %v605 = vld [vmem:[%s604] sm:$0xff]
          %vm606 = vcmask 64512
          %v608 = vsel %vm606, %v590, 0
          %v611 = vsel %vm606, %v603, 0
          %613 = vmatpush.xpose.msra.mxu0 0.0
          %614 = vmatpush.xpose.msra.mxu0 0.0
          %615 = vmatpush.xpose.msra.mxu0 0.0
          %616 = vmatpush.xpose.msra.mxu0 0.0
          %617 = vmatpush.xpose.msra.mxu0 0.0
          %618 = vmatpush.xpose.msra.mxu0 0.0
          %619 = vmatpush.xpose.msra.mxu0 0.0
          %620 = vmatpush.xpose.msra.mxu0 0.0
          %621 = vmatpush.xpose.msra.mxu0 0.0
          %622 = vmatpush.xpose.msra.mxu0 0.0
          %623 = vmatpush.xpose.msra.mxu0 0.0
          %624 = vmatpush.xpose.msra.mxu0 0.0
          %625 = vmatpush.xpose.msra.mxu0 0.0
          %626 = vmatpush.xpose.msra.mxu0 0.0
          %627 = vmatpush.xpose.msra.mxu0 0.0
          %628 = vmatpush.xpose.msra.mxu0 %v611
          %629 = vmatmul.f32.gmra.mxu0 %v608
          %v630 = vpop.f32.mrf.mxu0
          %v631 = vadd.f32 0.0, %v630
          %632 = vdwg.mxu0
          %v633 = vsel %vm606, %v631, -inf
          %634 = vmax.xlane.f32.xlu0 %v633
          %v635 = vpop.xlane.xlu0 %634
          %v636 = vmax.f32 %v598, %v635
          %v637 = vsub.f32 %v598, %v636
          %v638 = vmul.f32 %v637, 1.442695
          %v639 = vpow.pop %v638
          %v640 = vsub.f32 %v631, %v636
          %v641 = vmul.f32 %v640, 1.442695
          %v642 = vpow.pop %v641
          %v643 = vmul.f32 %v639, %v599
          %v644 = vsel %vm606, %v642, 0.0
          %645 = vadd.xlane.f32.xlu0 %v644
          %v646 = vpop.xlane.xlu0 %645
          %v647 = vadd.f32 %v643, %v646
          %v648 = vmul.f32 %v639, %v600
          %v650 = vsel %vm606, %v642, 0
          %652 = vmatpush.msra.mxu0 0.0
          %653 = vmatpush.msra.mxu0 0.0
          %654 = vmatpush.msra.mxu0 0.0
          %655 = vmatpush.msra.mxu0 0.0
          %656 = vmatpush.msra.mxu0 0.0
          %657 = vmatpush.msra.mxu0 0.0
          %658 = vmatpush.msra.mxu0 0.0
          %659 = vmatpush.msra.mxu0 0.0
          %660 = vmatpush.msra.mxu0 0.0
          %661 = vmatpush.msra.mxu0 0.0
          %662 = vmatpush.msra.mxu0 0.0
          %663 = vmatpush.msra.mxu0 0.0
          %664 = vmatpush.msra.mxu0 0.0
          %665 = vmatpush.msra.mxu0 0.0
          %666 = vmatpush.msra.mxu0 0.0
          %667 = vmatpush.msra.mxu0 %v605
          %668 = vmatmul.f32.gmra.mxu0 %v650
          %v669 = vpop.f32.mrf.mxu0
          %v670 = vadd.f32 0.0, %v669
          %671 = vdwg.mxu0
          %v672 = vadd.f32 %v648, %v670
        $region85: #{tpu_custom_call.1} parent=79 // loop_footer
          %s597 = sadd.s32 1, %s593
        $region86: #{tpu_custom_call.1} parent=79 // loop_footer_branch
          %592 = sbr.rel target = $region82
        $region87: #{tpu_custom_call.1} parent=79 // loop_exit
          _
        %v673 = vrcp.pop %v599
        %v674 = vmul.f32 %v600, %v673
        %v675 = vld [vmem:[#allocation2] sm:$0xff]
        %v676 = vld [vmem:[%s5] sm:$0xff]
        %vm677 = vcmask 64512
        %v679 = vsel %vm677, %v674, 0
        %681 = vmatpush.msra.mxu0 0.0
        %682 = vmatpush.msra.mxu0 0.0
        %683 = vmatpush.msra.mxu0 0.0
        %684 = vmatpush.msra.mxu0 0.0
        %685 = vmatpush.msra.mxu0 0.0
        %686 = vmatpush.msra.mxu0 0.0
        %687 = vmatpush.msra.mxu0 0.0
        %688 = vmatpush.msra.mxu0 0.0
        %689 = vmatpush.msra.mxu0 0.0
        %690 = vmatpush.msra.mxu0 0.0
        %691 = vmatpush.msra.mxu0 0.0
        %692 = vmatpush.msra.mxu0 0.0
        %693 = vmatpush.msra.mxu0 0.0
        %694 = vmatpush.msra.mxu0 0.0
        %695 = vmatpush.msra.mxu0 0.0
        %696 = vmatpush.msra.mxu0 %v676
        %697 = vmatmul.f32.gmra.mxu0 %v679
        %v698 = vpop.f32.mrf.mxu0
        %v699 = vadd.f32 0.0, %v698
        %700 = vdwg.mxu0
        %v701 = vadd.f32 %v675, %v699
        %702 = vst.msk [vmem:[#allocation2] sm:$0xff] %vm559, %v701
        %s703 = scalar_lea.vmem %s3, 32
        %v704 = vld [vmem:[%s703] sm:$0xff]
        %v705 = vld [vmem:[%s703 + $0x8] sm:$0xff]
        %v706 = vld [vmem:[%s703 + $0x10] sm:$0xff]
        %v707 = vld [vmem:[%s703 + $0x18] sm:$0xff]
        %s708 = scalar_lea.vmem %s4, 1
        %v709 = vld [vmem:[%s708] sm:$0x1]
        %v711 = vperm.slane %v709, 0
        %713 = vmatpush.msra.mxu0 0.0
        %714 = vmatpush.msra.mxu0 0.0
        %715 = vmatpush.msra.mxu0 0.0
        %716 = vmatpush.msra.mxu0 0.0
        %717 = vmatpush.msra.mxu0 0.0
        %718 = vmatpush.msra.mxu0 0.0
        %719 = vmatpush.msra.mxu0 0.0
        %720 = vmatpush.msra.mxu0 0.0
        %721 = vmatpush.msra.mxu0 0.0
        %722 = vmatpush.msra.mxu0 0.0
        %723 = vmatpush.msra.mxu0 0.0
        %724 = vmatpush.msra.mxu0 0.0
        %725 = vmatpush.msra.mxu0 %v707
        %726 = vmatpush.msra.mxu0 %v706
        %727 = vmatpush.msra.mxu0 %v705
        %728 = vmatpush.msra.mxu0 %v704
        %729 = vmatmul.f32.gmra.mxu0 %v570
        %v730 = vpop.f32.mrf.mxu0
        %v731 = vadd.f32 %v711, %v730
        %732 = vdwg.mxu0
        loop: start=0, step=1, limit=2
        $region88: #{tpu_custom_call.1} parent=79 // loop_pre_header
          _
        $region89: #{tpu_custom_call.1} parent=79 // loop_header
          %s734 = sphi 0, %s738
          %p735 = scmp.ge.s32.totalorder %s734, 2
          %v739 = vphi -1e+30, %v777
          %v740 = vphi 0.0, %v788
          %v741 = vphi 0.0, %v813
        $region90: #{tpu_custom_call.1} parent=79 // loop_header_branch
          %737 = sbr.rel (%p735) target = $region94
        $region91: #{tpu_custom_call.1} parent=79 // loop_body
          %s742 = smul.u32 %s734, 8
          %s743 = sadd.s32 %s742, 16
          %s744 = scalar_lea.vmem %s552, %s743
          %v745 = vld [vmem:[%s744] sm:$0xff]
          %s746 = scalar_lea.vmem %s557, %s743
          %v747 = vld [vmem:[%s746] sm:$0xff]
          %v749 = vsel %vm677, %v731, 0
          %v752 = vsel %vm677, %v745, 0
          %754 = vmatpush.xpose.msra.mxu0 0.0
          %755 = vmatpush.xpose.msra.mxu0 0.0
          %756 = vmatpush.xpose.msra.mxu0 0.0
          %757 = vmatpush.xpose.msra.mxu0 0.0
          %758 = vmatpush.xpose.msra.mxu0 0.0
          %759 = vmatpush.xpose.msra.mxu0 0.0
          %760 = vmatpush.xpose.msra.mxu0 0.0
          %761 = vmatpush.xpose.msra.mxu0 0.0
          %762 = vmatpush.xpose.msra.mxu0 0.0
          %763 = vmatpush.xpose.msra.mxu0 0.0
          %764 = vmatpush.xpose.msra.mxu0 0.0
          %765 = vmatpush.xpose.msra.mxu0 0.0
          %766 = vmatpush.xpose.msra.mxu0 0.0
          %767 = vmatpush.xpose.msra.mxu0 0.0
          %768 = vmatpush.xpose.msra.mxu0 0.0
          %769 = vmatpush.xpose.msra.mxu0 %v752
          %770 = vmatmul.f32.gmra.mxu0 %v749
          %v771 = vpop.f32.mrf.mxu0
          %v772 = vadd.f32 0.0, %v771
          %773 = vdwg.mxu0
          %v774 = vsel %vm677, %v772, -inf
          %775 = vmax.xlane.f32.xlu0 %v774
          %v776 = vpop.xlane.xlu0 %775
          %v777 = vmax.f32 %v739, %v776
          %v778 = vsub.f32 %v739, %v777
          %v779 = vmul.f32 %v778, 1.442695
          %v780 = vpow.pop %v779
          %v781 = vsub.f32 %v772, %v777
          %v782 = vmul.f32 %v781, 1.442695
          %v783 = vpow.pop %v782
          %v784 = vmul.f32 %v780, %v740
          %v785 = vsel %vm677, %v783, 0.0
          %786 = vadd.xlane.f32.xlu0 %v785
          %v787 = vpop.xlane.xlu0 %786
          %v788 = vadd.f32 %v784, %v787
          %v789 = vmul.f32 %v780, %v741
          %v791 = vsel %vm677, %v783, 0
          %793 = vmatpush.msra.mxu0 0.0
          %794 = vmatpush.msra.mxu0 0.0
          %795 = vmatpush.msra.mxu0 0.0
          %796 = vmatpush.msra.mxu0 0.0
          %797 = vmatpush.msra.mxu0 0.0
          %798 = vmatpush.msra.mxu0 0.0
          %799 = vmatpush.msra.mxu0 0.0
          %800 = vmatpush.msra.mxu0 0.0
          %801 = vmatpush.msra.mxu0 0.0
          %802 = vmatpush.msra.mxu0 0.0
          %803 = vmatpush.msra.mxu0 0.0
          %804 = vmatpush.msra.mxu0 0.0
          %805 = vmatpush.msra.mxu0 0.0
          %806 = vmatpush.msra.mxu0 0.0
          %807 = vmatpush.msra.mxu0 0.0
          %808 = vmatpush.msra.mxu0 %v747
          %809 = vmatmul.f32.gmra.mxu0 %v791
          %v810 = vpop.f32.mrf.mxu0
          %v811 = vadd.f32 0.0, %v810
          %812 = vdwg.mxu0
          %v813 = vadd.f32 %v789, %v811
        $region92: #{tpu_custom_call.1} parent=79 // loop_footer
          %s738 = sadd.s32 1, %s734
        $region93: #{tpu_custom_call.1} parent=79 // loop_footer_branch
          %733 = sbr.rel target = $region89
        $region94: #{tpu_custom_call.1} parent=79 // loop_exit
          _
        %v814 = vrcp.pop %v740
        %v815 = vmul.f32 %v741, %v814
        %v816 = vld [vmem:[#allocation2] sm:$0xff]
        %s817 = scalar_lea.vmem %s5, 8
        %v818 = vld [vmem:[%s817] sm:$0xff]
        %v820 = vsel %vm677, %v815, 0
        %822 = vmatpush.msra.mxu0 0.0
        %823 = vmatpush.msra.mxu0 0.0
        %824 = vmatpush.msra.mxu0 0.0
        %825 = vmatpush.msra.mxu0 0.0
        %826 = vmatpush.msra.mxu0 0.0
        %827 = vmatpush.msra.mxu0 0.0
        %828 = vmatpush.msra.mxu0 0.0
        %829 = vmatpush.msra.mxu0 0.0
        %830 = vmatpush.msra.mxu0 0.0
        %831 = vmatpush.msra.mxu0 0.0
        %832 = vmatpush.msra.mxu0 0.0
        %833 = vmatpush.msra.mxu0 0.0
        %834 = vmatpush.msra.mxu0 0.0
        %835 = vmatpush.msra.mxu0 0.0
        %836 = vmatpush.msra.mxu0 0.0
        %837 = vmatpush.msra.mxu0 %v818
        %838 = vmatmul.f32.gmra.mxu0 %v820
        %v839 = vpop.f32.mrf.mxu0
        %v840 = vadd.f32 0.0, %v839
        %841 = vdwg.mxu0
        %v842 = vadd.f32 %v816, %v840
        %843 = vst.msk [vmem:[#allocation2] sm:$0xff] %vm559, %v842
        %s844 = scalar_lea.vmem %s3, 64
        %v845 = vld [vmem:[%s844] sm:$0xff]
        %v846 = vld [vmem:[%s844 + $0x8] sm:$0xff]
        %v847 = vld [vmem:[%s844 + $0x10] sm:$0xff]
        %v848 = vld [vmem:[%s844 + $0x18] sm:$0xff]
        %s849 = scalar_lea.vmem %s4, 2
        %v850 = vld [vmem:[%s849] sm:$0x1]
        %v852 = vperm.slane %v850, 0
        %854 = vmatpush.msra.mxu0 0.0
        %855 = vmatpush.msra.mxu0 0.0
        %856 = vmatpush.msra.mxu0 0.0
        %857 = vmatpush.msra.mxu0 0.0
        %858 = vmatpush.msra.mxu0 0.0
        %859 = vmatpush.msra.mxu0 0.0
        %860 = vmatpush.msra.mxu0 0.0
        %861 = vmatpush.msra.mxu0 0.0
        %862 = vmatpush.msra.mxu0 0.0
        %863 = vmatpush.msra.mxu0 0.0
        %864 = vmatpush.msra.mxu0 0.0
        %865 = vmatpush.msra.mxu0 0.0
        %866 = vmatpush.msra.mxu0 %v848
        %867 = vmatpush.msra.mxu0 %v847
        %868 = vmatpush.msra.mxu0 %v846
        %869 = vmatpush.msra.mxu0 %v845
        %870 = vmatmul.f32.gmra.mxu0 %v570
        %v871 = vpop.f32.mrf.mxu0
        %v872 = vadd.f32 %v852, %v871
        %873 = vdwg.mxu0
        loop: start=0, step=1, limit=2
        $region95: #{tpu_custom_call.1} parent=79 // loop_pre_header
          _
        $region96: #{tpu_custom_call.1} parent=79 // loop_header
          %s875 = sphi 0, %s879
          %p876 = scmp.ge.s32.totalorder %s875, 2
          %v880 = vphi -1e+30, %v918
          %v881 = vphi 0.0, %v929
          %v882 = vphi 0.0, %v954
        $region97: #{tpu_custom_call.1} parent=79 // loop_header_branch
          %878 = sbr.rel (%p876) target = $region101
        $region98: #{tpu_custom_call.1} parent=79 // loop_body
          %s883 = smul.u32 %s875, 8
          %s884 = sadd.s32 %s883, 32
          %s885 = scalar_lea.vmem %s552, %s884
          %v886 = vld [vmem:[%s885] sm:$0xff]
          %s887 = scalar_lea.vmem %s557, %s884
          %v888 = vld [vmem:[%s887] sm:$0xff]
          %v890 = vsel %vm677, %v872, 0
          %v893 = vsel %vm677, %v886, 0
          %895 = vmatpush.xpose.msra.mxu0 0.0
          %896 = vmatpush.xpose.msra.mxu0 0.0
          %897 = vmatpush.xpose.msra.mxu0 0.0
          %898 = vmatpush.xpose.msra.mxu0 0.0
          %899 = vmatpush.xpose.msra.mxu0 0.0
          %900 = vmatpush.xpose.msra.mxu0 0.0
          %901 = vmatpush.xpose.msra.mxu0 0.0
          %902 = vmatpush.xpose.msra.mxu0 0.0
          %903 = vmatpush.xpose.msra.mxu0 0.0
          %904 = vmatpush.xpose.msra.mxu0 0.0
          %905 = vmatpush.xpose.msra.mxu0 0.0
          %906 = vmatpush.xpose.msra.mxu0 0.0
          %907 = vmatpush.xpose.msra.mxu0 0.0
          %908 = vmatpush.xpose.msra.mxu0 0.0
          %909 = vmatpush.xpose.msra.mxu0 0.0
          %910 = vmatpush.xpose.msra.mxu0 %v893
          %911 = vmatmul.f32.gmra.mxu0 %v890
          %v912 = vpop.f32.mrf.mxu0
          %v913 = vadd.f32 0.0, %v912
          %914 = vdwg.mxu0
          %v915 = vsel %vm677, %v913, -inf
          %916 = vmax.xlane.f32.xlu0 %v915
          %v917 = vpop.xlane.xlu0 %916
          %v918 = vmax.f32 %v880, %v917
          %v919 = vsub.f32 %v880, %v918
          %v920 = vmul.f32 %v919, 1.442695
          %v921 = vpow.pop %v920
          %v922 = vsub.f32 %v913, %v918
          %v923 = vmul.f32 %v922, 1.442695
          %v924 = vpow.pop %v923
          %v925 = vmul.f32 %v921, %v881
          %v926 = vsel %vm677, %v924, 0.0
          %927 = vadd.xlane.f32.xlu0 %v926
          %v928 = vpop.xlane.xlu0 %927
          %v929 = vadd.f32 %v925, %v928
          %v930 = vmul.f32 %v921, %v882
          %v932 = vsel %vm677, %v924, 0
          %934 = vmatpush.msra.mxu0 0.0
          %935 = vmatpush.msra.mxu0 0.0
          %936 = vmatpush.msra.mxu0 0.0
          %937 = vmatpush.msra.mxu0 0.0
          %938 = vmatpush.msra.mxu0 0.0
          %939 = vmatpush.msra.mxu0 0.0
          %940 = vmatpush.msra.mxu0 0.0
          %941 = vmatpush.msra.mxu0 0.0
          %942 = vmatpush.msra.mxu0 0.0
          %943 = vmatpush.msra.mxu0 0.0
          %944 = vmatpush.msra.mxu0 0.0
          %945 = vmatpush.msra.mxu0 0.0
          %946 = vmatpush.msra.mxu0 0.0
          %947 = vmatpush.msra.mxu0 0.0
          %948 = vmatpush.msra.mxu0 0.0
          %949 = vmatpush.msra.mxu0 %v888
          %950 = vmatmul.f32.gmra.mxu0 %v932
          %v951 = vpop.f32.mrf.mxu0
          %v952 = vadd.f32 0.0, %v951
          %953 = vdwg.mxu0
          %v954 = vadd.f32 %v930, %v952
        $region99: #{tpu_custom_call.1} parent=79 // loop_footer
          %s879 = sadd.s32 1, %s875
        $region100: #{tpu_custom_call.1} parent=79 // loop_footer_branch
          %874 = sbr.rel target = $region96
        $region101: #{tpu_custom_call.1} parent=79 // loop_exit
          _
        %v955 = vrcp.pop %v881
        %v956 = vmul.f32 %v882, %v955
        %v957 = vld [vmem:[#allocation2] sm:$0xff]
        %s958 = scalar_lea.vmem %s5, 16
        %v959 = vld [vmem:[%s958] sm:$0xff]
        %v961 = vsel %vm677, %v956, 0
        %963 = vmatpush.msra.mxu0 0.0
        %964 = vmatpush.msra.mxu0 0.0
        %965 = vmatpush.msra.mxu0 0.0
        %966 = vmatpush.msra.mxu0 0.0
        %967 = vmatpush.msra.mxu0 0.0
        %968 = vmatpush.msra.mxu0 0.0
        %969 = vmatpush.msra.mxu0 0.0
        %970 = vmatpush.msra.mxu0 0.0
        %971 = vmatpush.msra.mxu0 0.0
        %972 = vmatpush.msra.mxu0 0.0
        %973 = vmatpush.msra.mxu0 0.0
        %974 = vmatpush.msra.mxu0 0.0
        %975 = vmatpush.msra.mxu0 0.0
        %976 = vmatpush.msra.mxu0 0.0
        %977 = vmatpush.msra.mxu0 0.0
        %978 = vmatpush.msra.mxu0 %v959
        %979 = vmatmul.f32.gmra.mxu0 %v961
        %v980 = vpop.f32.mrf.mxu0
        %v981 = vadd.f32 0.0, %v980
        %982 = vdwg.mxu0
        %v983 = vadd.f32 %v957, %v981
        %984 = vst.msk [vmem:[#allocation2] sm:$0xff] %vm559, %v983
        %s985 = scalar_lea.vmem %s3, 96
        %v986 = vld [vmem:[%s985] sm:$0xff]
        %v987 = vld [vmem:[%s985 + $0x8] sm:$0xff]
        %v988 = vld [vmem:[%s985 + $0x10] sm:$0xff]
        %v989 = vld [vmem:[%s985 + $0x18] sm:$0xff]
        %s990 = scalar_lea.vmem %s4, 3
        %v991 = vld [vmem:[%s990] sm:$0x1]
        %v993 = vperm.slane %v991, 0
        %995 = vmatpush.msra.mxu0 0.0
        %996 = vmatpush.msra.mxu0 0.0
        %997 = vmatpush.msra.mxu0 0.0
        %998 = vmatpush.msra.mxu0 0.0
        %999 = vmatpush.msra.mxu0 0.0
        %1000 = vmatpush.msra.mxu0 0.0
        %1001 = vmatpush.msra.mxu0 0.0
        %1002 = vmatpush.msra.mxu0 0.0
        %1003 = vmatpush.msra.mxu0 0.0
        %1004 = vmatpush.msra.mxu0 0.0
        %1005 = vmatpush.msra.mxu0 0.0
        %1006 = vmatpush.msra.mxu0 0.0
        %1007 = vmatpush.msra.mxu0 %v989
        %1008 = vmatpush.msra.mxu0 %v988
        %1009 = vmatpush.msra.mxu0 %v987
        %1010 = vmatpush.msra.mxu0 %v986
        %1011 = vmatmul.f32.gmra.mxu0 %v570
        %v1012 = vpop.f32.mrf.mxu0
        %v1013 = vadd.f32 %v993, %v1012
        %1014 = vdwg.mxu0
        loop: start=0, step=1, limit=2
        $region102: #{tpu_custom_call.1} parent=79 // loop_pre_header
          _
        $region103: #{tpu_custom_call.1} parent=79 // loop_header
          %s1016 = sphi 0, %s1020
          %p1017 = scmp.ge.s32.totalorder %s1016, 2
          %v1021 = vphi -1e+30, %v1059
          %v1022 = vphi 0.0, %v1070
          %v1023 = vphi 0.0, %v1095
        $region104: #{tpu_custom_call.1} parent=79 // loop_header_branch
          %1019 = sbr.rel (%p1017) target = $region108
        $region105: #{tpu_custom_call.1} parent=79 // loop_body
          %s1024 = smul.u32 %s1016, 8
          %s1025 = sadd.s32 %s1024, 48
          %s1026 = scalar_lea.vmem %s552, %s1025
          %v1027 = vld [vmem:[%s1026] sm:$0xff]
          %s1028 = scalar_lea.vmem %s557, %s1025
          %v1029 = vld [vmem:[%s1028] sm:$0xff]
          %v1031 = vsel %vm677, %v1013, 0
          %v1034 = vsel %vm677, %v1027, 0
          %1036 = vmatpush.xpose.msra.mxu0 0.0
          %1037 = vmatpush.xpose.msra.mxu0 0.0
          %1038 = vmatpush.xpose.msra.mxu0 0.0
          %1039 = vmatpush.xpose.msra.mxu0 0.0
          %1040 = vmatpush.xpose.msra.mxu0 0.0
          %1041 = vmatpush.xpose.msra.mxu0 0.0
          %1042 = vmatpush.xpose.msra.mxu0 0.0
          %1043 = vmatpush.xpose.msra.mxu0 0.0
          %1044 = vmatpush.xpose.msra.mxu0 0.0
          %1045 = vmatpush.xpose.msra.mxu0 0.0
          %1046 = vmatpush.xpose.msra.mxu0 0.0
          %1047 = vmatpush.xpose.msra.mxu0 0.0
          %1048 = vmatpush.xpose.msra.mxu0 0.0
          %1049 = vmatpush.xpose.msra.mxu0 0.0
          %1050 = vmatpush.xpose.msra.mxu0 0.0
          %1051 = vmatpush.xpose.msra.mxu0 %v1034
          %1052 = vmatmul.f32.gmra.mxu0 %v1031
          %v1053 = vpop.f32.mrf.mxu0
          %v1054 = vadd.f32 0.0, %v1053
          %1055 = vdwg.mxu0
          %v1056 = vsel %vm677, %v1054, -inf
          %1057 = vmax.xlane.f32.xlu0 %v1056
          %v1058 = vpop.xlane.xlu0 %1057
          %v1059 = vmax.f32 %v1021, %v1058
          %v1060 = vsub.f32 %v1021, %v1059
          %v1061 = vmul.f32 %v1060, 1.442695
          %v1062 = vpow.pop %v1061
          %v1063 = vsub.f32 %v1054, %v1059
          %v1064 = vmul.f32 %v1063, 1.442695
          %v1065 = vpow.pop %v1064
          %v1066 = vmul.f32 %v1062, %v1022
          %v1067 = vsel %vm677, %v1065, 0.0
          %1068 = vadd.xlane.f32.xlu0 %v1067
          %v1069 = vpop.xlane.xlu0 %1068
          %v1070 = vadd.f32 %v1066, %v1069
          %v1071 = vmul.f32 %v1062, %v1023
          %v1073 = vsel %vm677, %v1065, 0
          %1075 = vmatpush.msra.mxu0 0.0
          %1076 = vmatpush.msra.mxu0 0.0
          %1077 = vmatpush.msra.mxu0 0.0
          %1078 = vmatpush.msra.mxu0 0.0
          %1079 = vmatpush.msra.mxu0 0.0
          %1080 = vmatpush.msra.mxu0 0.0
          %1081 = vmatpush.msra.mxu0 0.0
          %1082 = vmatpush.msra.mxu0 0.0
          %1083 = vmatpush.msra.mxu0 0.0
          %1084 = vmatpush.msra.mxu0 0.0
          %1085 = vmatpush.msra.mxu0 0.0
          %1086 = vmatpush.msra.mxu0 0.0
          %1087 = vmatpush.msra.mxu0 0.0
          %1088 = vmatpush.msra.mxu0 0.0
          %1089 = vmatpush.msra.mxu0 0.0
          %1090 = vmatpush.msra.mxu0 %v1029
          %1091 = vmatmul.f32.gmra.mxu0 %v1073
          %v1092 = vpop.f32.mrf.mxu0
          %v1093 = vadd.f32 0.0, %v1092
          %1094 = vdwg.mxu0
          %v1095 = vadd.f32 %v1071, %v1093
        $region106: #{tpu_custom_call.1} parent=79 // loop_footer
          %s1020 = sadd.s32 1, %s1016
        $region107: #{tpu_custom_call.1} parent=79 // loop_footer_branch
          %1015 = sbr.rel target = $region103
        $region108: #{tpu_custom_call.1} parent=79 // loop_exit
          _
        %v1096 = vrcp.pop %v1022
        %v1097 = vmul.f32 %v1023, %v1096
        %v1098 = vld [vmem:[#allocation2] sm:$0xff]
        %s1099 = scalar_lea.vmem %s5, 24
        %v1100 = vld [vmem:[%s1099] sm:$0xff]
        %v1102 = vsel %vm677, %v1097, 0
        %1104 = vmatpush.msra.mxu0 0.0
        %1105 = vmatpush.msra.mxu0 0.0
        %1106 = vmatpush.msra.mxu0 0.0
        %1107 = vmatpush.msra.mxu0 0.0
        %1108 = vmatpush.msra.mxu0 0.0
        %1109 = vmatpush.msra.mxu0 0.0
        %1110 = vmatpush.msra.mxu0 0.0
        %1111 = vmatpush.msra.mxu0 0.0
        %1112 = vmatpush.msra.mxu0 0.0
        %1113 = vmatpush.msra.mxu0 0.0
        %1114 = vmatpush.msra.mxu0 0.0
        %1115 = vmatpush.msra.mxu0 0.0
        %1116 = vmatpush.msra.mxu0 0.0
        %1117 = vmatpush.msra.mxu0 0.0
        %1118 = vmatpush.msra.mxu0 0.0
        %1119 = vmatpush.msra.mxu0 %v1100
        %1120 = vmatmul.f32.gmra.mxu0 %v1102
        %v1121 = vpop.f32.mrf.mxu0
        %v1122 = vadd.f32 0.0, %v1121
        %1123 = vdwg.mxu0
        %v1124 = vadd.f32 %v1098, %v1122
        %1125 = vst.msk [vmem:[#allocation2] sm:$0xff] %vm559, %v1124
        %v1126 = vld [vmem:[%s547] sm:$0xff]
        %v1127 = vld [vmem:[#allocation2] sm:$0xff]
        %v1128 = vadd.f32 %v1126, %v1127
        %v1129 = vld [vmem:[%s6] sm:$0x1]
        %v1131 = vperm.slane %v1129, 0
        %v1133 = vadd.f32 %v1128, %v1131
        %v1134 = vld [vmem:[%s11] sm:$0x1]
        %v1135 = vld [vmem:[%s12] sm:$0x1]
        %v1136 = vsel %vm559, %v1133, 0.0
        %1137 = vadd.xlane.f32.xlu0 %v1136
        %v1138 = vpop.xlane.xlu0 %1137
        %v1139 = vrcp.pop 32.0
        %v1140 = vmul.f32 32.0, %v1139
        %v1141 = vsub.f32 1.0, %v1140
        %v1142 = vmul.f32 %v1139, %v1141
        %v1143 = vadd.f32 %v1139, %v1142
        %vm1144 = vweird.f32 %v1139
        %v1145 = vsel %vm1144, %v1139, %v1143
        %v1146 = vmul.f32 %v1138, %v1145
        %v1147 = vsub.f32 %v1133, %v1146
        %v1148 = vmul.f32 %v1147, %v1147
        %v1149 = vsel %vm559, %v1148, 0.0
        %1150 = vadd.xlane.f32.xlu0 %v1149
        %v1151 = vpop.xlane.xlu0 %1150
        %v1152 = vmul.f32 %v1151, %v1145
        %v1153 = vadd.f32 %v1152, 1e-05
        %v1154 = vrsqrt.pop %v1153
        %v1155 = vmul.f32 %v1154, %v1153
        %v1156 = vmul.f32 %v1155, %v1154
        %v1157 = vmul.f32 0.5, %v1156
        %v1158 = vsub.f32 1.5, %v1157
        %v1159 = vmul.f32 %v1154, %v1158
        %vm1160 = vweird.f32 %v1153
        %vm1161 = vweird.f32 %v1154
        %vm1162 = vmor %vm1160, %vm1161
        %v1163 = vsel %vm1162, %v1154, %v1159
        %v1164 = vmul.f32 %v1147, %v1163
        %v1166 = vperm.slane %v1134, 0
        %v1168 = vmul.f32 %v1164, %v1166
        %v1170 = vperm.slane %v1135, 0
        %v1172 = vadd.f32 %v1168, %v1170
        %1173 = vst.msk [vmem:[#allocation3] sm:$0xff] %vm559, %v1172
        %1174 = vst.msk [vmem:[#allocation2] sm:$0xff] %vm559, 0.0
        loop: start=0, step=1, limit=2
        $region109: #{tpu_custom_call.1} parent=79 // loop_pre_header
          _
        $region110: #{tpu_custom_call.1} parent=79 // loop_header
          %s1176 = sphi 0, %s1180
          %p1177 = scmp.ge.s32.totalorder %s1176, 2
        $region111: #{tpu_custom_call.1} parent=79 // loop_header_branch
          %1179 = sbr.rel (%p1177) target = $region115
        $region112: #{tpu_custom_call.1} parent=79 // loop_body
          %s1181 = smul.u32 %s1176, 32
          %s1182 = scalar_lea.vmem %s7, %s1181
          %v1183 = vld [vmem:[%s1182] sm:$0xff]
          %v1184 = vld [vmem:[%s1182 + $0x8] sm:$0xff]
          %v1185 = vld [vmem:[%s1182 + $0x10] sm:$0xff]
          %v1186 = vld [vmem:[%s1182 + $0x18] sm:$0xff]
          %s1187 = scalar_lea.vmem %s8, %s1176
          %v1188 = vld [vmem:[%s1187] sm:$0x1]
          %v1190 = vperm.slane %v1188, 0
          %v1193 = vsel %vm559, %v1172, 0
          %1195 = vmatpush.msra.mxu0 0.0
          %1196 = vmatpush.msra.mxu0 0.0
          %1197 = vmatpush.msra.mxu0 0.0
          %1198 = vmatpush.msra.mxu0 0.0
          %1199 = vmatpush.msra.mxu0 0.0
          %1200 = vmatpush.msra.mxu0 0.0
          %1201 = vmatpush.msra.mxu0 0.0
          %1202 = vmatpush.msra.mxu0 0.0
          %1203 = vmatpush.msra.mxu0 0.0
          %1204 = vmatpush.msra.mxu0 0.0
          %1205 = vmatpush.msra.mxu0 0.0
          %1206 = vmatpush.msra.mxu0 0.0
          %1207 = vmatpush.msra.mxu0 %v1186
          %1208 = vmatpush.msra.mxu0 %v1185
          %1209 = vmatpush.msra.mxu0 %v1184
          %1210 = vmatpush.msra.mxu0 %v1183
          %1211 = vmatmul.f32.gmra.mxu0 %v1193
          %v1212 = vpop.f32.mrf.mxu0
          %v1213 = vadd.f32 %v1190, %v1212
          %1214 = vdwg.mxu0
          %v1215 = vmax.f32 %v1213, 0.0
          %v1216 = vld [vmem:[#allocation2] sm:$0xff]
          %s1217 = scalar_lea.vmem %s9, %s1181
          %v1218 = vld [vmem:[%s1217] sm:$0xff]
          %v1219 = vld [vmem:[%s1217 + $0x8] sm:$0xff]
          %v1220 = vld [vmem:[%s1217 + $0x10] sm:$0xff]
          %v1221 = vld [vmem:[%s1217 + $0x18] sm:$0xff]
          %v1223 = vsel %vm559, %v1215, 0
          %1225 = vmatpush.msra.mxu0 0.0
          %1226 = vmatpush.msra.mxu0 0.0
          %1227 = vmatpush.msra.mxu0 0.0
          %1228 = vmatpush.msra.mxu0 0.0
          %1229 = vmatpush.msra.mxu0 0.0
          %1230 = vmatpush.msra.mxu0 0.0
          %1231 = vmatpush.msra.mxu0 0.0
          %1232 = vmatpush.msra.mxu0 0.0
          %1233 = vmatpush.msra.mxu0 0.0
          %1234 = vmatpush.msra.mxu0 0.0
          %1235 = vmatpush.msra.mxu0 0.0
          %1236 = vmatpush.msra.mxu0 0.0
          %1237 = vmatpush.msra.mxu0 %v1221
          %1238 = vmatpush.msra.mxu0 %v1220
          %1239 = vmatpush.msra.mxu0 %v1219
          %1240 = vmatpush.msra.mxu0 %v1218
          %1241 = vmatmul.f32.gmra.mxu0 %v1223
          %v1242 = vpop.f32.mrf.mxu0
          %v1243 = vadd.f32 0.0, %v1242
          %1244 = vdwg.mxu0
          %v1245 = vadd.f32 %v1216, %v1243
          %1246 = vst.msk [vmem:[#allocation2] sm:$0xff] %vm559, %v1245
        $region113: #{tpu_custom_call.1} parent=79 // loop_footer
          %s1180 = sadd.s32 1, %s1176
        $region114: #{tpu_custom_call.1} parent=79 // loop_footer_branch
          %1175 = sbr.rel target = $region110
        $region115: #{tpu_custom_call.1} parent=79 // loop_exit
          _
        %v1247 = vld [vmem:[#allocation3] sm:$0xff]
        %v1248 = vld [vmem:[#allocation2] sm:$0xff]
        %v1249 = vadd.f32 %v1247, %v1248
        %v1250 = vld [vmem:[%s10] sm:$0x1]
        %v1252 = vperm.slane %v1250, 0
        %v1254 = vadd.f32 %v1249, %v1252
        %v1255 = vld [vmem:[%s13] sm:$0x1]
        %v1256 = vld [vmem:[%s14] sm:$0x1]
        %v1257 = vsel %vm559, %v1254, 0.0
        %1258 = vadd.xlane.f32.xlu0 %v1257
        %v1259 = vpop.xlane.xlu0 %1258
        %v1260 = vmul.f32 %v1259, %v1145
        %v1261 = vsub.f32 %v1254, %v1260
        %v1262 = vmul.f32 %v1261, %v1261
        %v1263 = vsel %vm559, %v1262, 0.0
        %1264 = vadd.xlane.f32.xlu0 %v1263
        %v1265 = vpop.xlane.xlu0 %1264
        %v1266 = vmul.f32 %v1265, %v1145
        %v1267 = vadd.f32 %v1266, 1e-05
        %v1268 = vrsqrt.pop %v1267
        %v1269 = vmul.f32 %v1268, %v1267
        %v1270 = vmul.f32 %v1269, %v1268
        %v1271 = vmul.f32 0.5, %v1270
        %v1272 = vsub.f32 1.5, %v1271
        %v1273 = vmul.f32 %v1268, %v1272
        %vm1274 = vweird.f32 %v1267
        %vm1275 = vweird.f32 %v1268
        %vm1276 = vmor %vm1274, %vm1275
        %v1277 = vsel %vm1276, %v1268, %v1273
        %v1278 = vmul.f32 %v1261, %v1277
        %v1280 = vperm.slane %v1255, 0
        %v1282 = vmul.f32 %v1278, %v1280
        %v1284 = vperm.slane %v1256, 0
        %v1286 = vadd.f32 %v1282, %v1284
        %1287 = vst.msk [vmem:[%s539] sm:$0xff] %vm559, %v1286
        %s1288 = sand.u32 %s383, 1
        %s1289 = scalar_lea.sflag [#allocation5], %s1288
        %s1290 = sand.u32 %s383, 1
        %s1291 = smul.addr %s1290, 8
        %s1292 = scalar_lea.vmem [#allocation4], %s1291
        // Predicated region
        $region116: #{tpu_custom_call.1} parent=79 // pred_check
          %p1293 = pneg %p393
        $region117: #{tpu_custom_call.1} parent=79 // pred_check_branch
          %1295 = sbr.rel (%p1293) target = $region119
        $region118: #{tpu_custom_call.1} parent=79 // pred_region
          %1297 = vsyncadd %s1289, 0
          %s1298 = smul.addr %s33, 2
          %s1299 = sadd.s32 %s34, %s1298
          %s1300 = smul.addr %s1299, 8
          %s1301 = scalar_lea.hbm %s15, %s1300
          %s1303 = sshll.u32 %s1292, 4
          %s1304 = int_to_ptr.vmem [resolvable:$true] %s1303
          %s1305 = sshll.u32 %s1301, 4
          %s1306 = int_to_ptr.hbm [resolvable:$true] %s1305
          %1308 = dma.vmem_to_hbm [thread:$0]  %s1304, 128, %s1306, %s1289
        $region119: #{tpu_custom_call.1} parent=79 // pred_fallthru
          _
      $region80: #{tpu_custom_call.1} parent=5 // pred_fallthru
        _
      %p1309 = scmp.le.s32.totalorder 2, %s24
      // Predicated region
      $region120: #{tpu_custom_call.1} parent=5 // pred_check
        %p1310 = pneg %p1309
      $region121: #{tpu_custom_call.1} parent=5 // pred_check_branch
        %1312 = sbr.rel (%p1310) target = $region123
      $region122: #{tpu_custom_call.1} parent=5 // pred_region
        %s1313 = ssub.s32 %s24, 2
        // Predicated region
        $region124: #{tpu_custom_call.1} parent=122 // pred_check
          %p1314 = pneg %p399
        $region125: #{tpu_custom_call.1} parent=122 // pred_check_branch
          %1316 = sbr.rel (%p1314) target = $region127
        $region126: #{tpu_custom_call.1} parent=122 // pred_region
          %s1317 = sand.u32 %s384, 1
          %s1318 = scalar_lea.sflag [#allocation5], %s1317
          %s1319 = sand.u32 %s384, 1
          %s1320 = smul.addr %s1319, 8
          %s1321 = scalar_lea.vmem [#allocation4], %s1320
          %1323 = dma.done %s1318, 128
        $region127: #{tpu_custom_call.1} parent=122 // pred_fallthru
          _
      $region123: #{tpu_custom_call.1} parent=5 // pred_fallthru
        _
    $region6: #{tpu_custom_call.1} parent=1 // loop_footer
      %s28 = sadd.s32 1, %s24
    $region7: #{tpu_custom_call.1} parent=1 // loop_footer_branch
      %23 = sbr.rel target = $region3
    $region8: #{tpu_custom_call.1} parent=1 // loop_exit
      _
    %1324 = vsyncpa [#allocation5], 1
    %s1325 = scalar_lea.sflag [#allocation5], 1
    %1326 = vsyncpa %s1325, 1

</llo_original>
